<compile_context>
chip_gen: v7x
topology: tpu7x:2x2x1
jax: 0.10.0
libtpu: 0.0.40
codegen_flags: <defaults>
</compile_context>

<pallas_src>
import functools
import math

import jax
import jax.numpy as jnp
from jax.experimental import pallas as pl
from jax.experimental.pallas import tpu as pltpu


def _round_up(a: int, b: int) -> int:
    return ((a + b - 1) // b) * b


def _cdiv(a: int, b: int) -> int:
    return (a + b - 1) // b


# ----------------------------------------------------------------------------
# Pallas kernel: fused (1x1 conv + graph aggregation + bias) matmul tile
# ----------------------------------------------------------------------------
def _gcn_fused_kernel(x_ref, m_ref, b_ref, o_ref):
    # x_ref: (TR, Kd)   bf16  -- row tile of channels-last activations
    # m_ref: (Kd, TC)   bf16  -- column tile of the folded (conv x A) weight
    # b_ref: (1,  TC)   f32   -- folded effective bias
    # o_ref: (TR, TC)   bf16  -- f32 accumulate, bf16 store (memory-bound win)
    acc = jnp.dot(x_ref[...], m_ref[...], preferred_element_type=jnp.float32)
    o_ref[...] = (acc + b_ref[...]).astype(o_ref.dtype)


def _choose_tiles(R, Kd, Nd, out_itemsize, row_tile_hint):
    """Pick (row_tile, col_tile) from explicit VMEM byte budgets."""
    # Column tile: multiple of 128, double-buffered M tile under ~12 MiB.
    m_budget = 12 * 1024 * 1024
    tc = min(Nd, max(128, (m_budget // (2 * 2 * Kd)) // 128 * 128))
    if Nd % 128 != 0:
        # Unpadded (tiny-channel) case: full-dim block is the only legal shape.
        tc = Nd
    # Row tile: multiple of 16 (bf16 sublane packing), bounded by VMEM budget,
    # by the caller hint, and capped so there are >= 2 row steps (v7x megacore).
    if R <= 16:
        tr = R  # full-dim block
    else:
        per_row_bytes = Kd * 2 + tc * out_itemsize
        vmem_budget = 20 * 1024 * 1024
        tr = max(16, (vmem_budget // (2 * per_row_bytes)) // 16 * 16)
        tr = min(tr, max(16, (row_tile_hint // 16) * 16))
        tr = min(tr, _round_up(_cdiv(R, 2), 16))   # at least 2 row steps
        tr = min(tr, _round_up(R, 16))
    return tr, tc


def _fused_gcn_matmul(x2, m2, b2, out_dtype, row_tile_hint):
    """x2: (R, Kd) bf16, m2: (Kd, Nd) bf16, b2: (1, Nd) f32 -> (R, Nd) bf16."""
    R, Kd = x2.shape
    Nd = m2.shape[1]
    out_itemsize = jnp.dtype(out_dtype).itemsize
    tr, tc = _choose_tiles(R, Kd, Nd, out_itemsize, row_tile_hint)
    grid = (_cdiv(R, tr), _cdiv(Nd, tc))

    # Actual double-buffered VMEM requirement + headroom; never request the
    # whole 64 MiB of a v7x core.
    need = (2 * (tr * Kd * 2) + 2 * (Kd * tc * 2)
            + 2 * (tr * tc * out_itemsize) + 2 * (tc * 4))
    vmem_limit = int(min(48 * 1024 * 1024,
                         max(16 * 1024 * 1024, need + 8 * 1024 * 1024)))

    return pl.pallas_call(
        _gcn_fused_kernel,
        out_shape=jax.ShapeDtypeStruct((R, Nd), out_dtype),
        grid=grid,
        in_specs=[
            pl.BlockSpec((tr, Kd), lambda i, j: (i, 0)),   # x row tile
            pl.BlockSpec((Kd, tc), lambda i, j: (0, j)),   # folded weight cols
            pl.BlockSpec((1, tc), lambda i, j: (0, j)),    # folded bias cols
        ],
        out_specs=pl.BlockSpec((tr, tc), lambda i, j: (i, j)),
        compiler_params=pltpu.CompilerParams(
            dimension_semantics=("parallel", "parallel"),
            vmem_limit_bytes=vmem_limit,
        ),
    )(x2, m2, b2)


# ----------------------------------------------------------------------------
# GCN_Block forward (wrapper: dtype/layout plumbing + weight fold + kernel)
# ----------------------------------------------------------------------------
@functools.partial(jax.jit, static_argnames=("row_tile", "channels_last_out"))
def gcn_block_forward(x, A, weight, bias, *, row_tile=1024,
                      channels_last_out=False):
    """GCN_Block.forward.

    x:      (N, Cin, T, V)  float32
    A:      (K, V, V)       float32
    weight: (K*Cout, Cin, 1, 1) or (K*Cout, Cin)   (torch Conv2d 1x1 weight)
    bias:   (K*Cout,)
    returns (out, A); out is (N, Cout, T, V) f32, or (N, T, V, Cout) bf16 when
    channels_last_out=True (lets a channels-last consumer skip the transpose).
    """
    N, Cin, T, V = x.shape
    K = A.shape[0]
    if weight.ndim == 4:
        # TODO(synk): general t_kernel_size>1 needs a T-halo BlockSpec.
        assert weight.shape[2] == 1 and weight.shape[3] == 1
        weight = weight.reshape(weight.shape[0], weight.shape[1])
    KCout, Cin_w = weight.shape
    assert Cin_w == Cin and KCout % K == 0
    Cout = KCout // K

    # ---- output-node padding (weight side only) for lane-dense stores ----
    step = 128 // math.gcd(Cout, 128)
    W_pad = _round_up(V, step)
    if W_pad > 2 * V:          # don't blow up tiny-channel configs
        W_pad = V

    # ---- weight-only fold: conv weight x adjacency -> one dense operator ----
    Wk = weight.astype(jnp.float32).reshape(K, Cout, Cin)        # W[k*Cout+c, i]
    Af = A.astype(jnp.float32)
    A_pad = jnp.pad(Af, ((0, 0), (0, 0), (0, W_pad - V))) if W_pad != V else Af
    # M[v, i, w, c] = sum_k A[k, v, w] * Wk[k, c, i]
    M = jnp.einsum("kvw,kci->viwc", A_pad, Wk)
    M2 = M.reshape(V * Cin, W_pad * Cout).astype(jnp.bfloat16)
    # beff[w, c] = sum_k b[k*Cout+c] * sum_v A[k, v, w]
    beff = jnp.einsum("kvw,kc->wc", A_pad,
                      bias.astype(jnp.float32).reshape(K, Cout))
    b2 = beff.reshape(1, W_pad * Cout).astype(jnp.float32)

    # ---- activations: bf16 FIRST, then channels-last; rows over (N, T) ----
    x2 = jnp.transpose(x.astype(jnp.bfloat16), (0, 2, 3, 1)).reshape(
        N * T, V * Cin)

    out2 = _fused_gcn_matmul(x2, M2, b2, jnp.bfloat16, row_tile)  # (N*T, W_pad*Cout)
    out_nl = out2.reshape(N, T, W_pad, Cout)[:, :, :V, :]          # drop padded w
    if channels_last_out:
        return out_nl, A                                           # (N,T,V,Cout) bf16
    out = out_nl.transpose(0, 3, 1, 2).astype(jnp.float32)         # (N,Cout,T,V) f32
    return out, A


# ----------------------------------------------------------------------------
# Plain-JAX f32 reference of the PyTorch module (for self-check)
# ----------------------------------------------------------------------------
def gcn_block_reference(x, A, weight, bias):
    N, Cin, T, V = x.shape
    K = A.shape[0]
    if weight.ndim == 4:
        weight = weight.reshape(weight.shape[0], weight.shape[1])
    Cout = weight.shape[0] // K
    y = jnp.einsum("nitv,oi->notv", x, weight) + bias[None, :, None, None]
    y = y.reshape(N, K, Cout, T, V)
    out = jnp.einsum("nkctv,kvw->nctw", y, A)
    return out, A


# ----------------------------------------------------------------------------
if __name__ == "__main__":
    # Small, module-consistent shapes: x (N, Cin, T, V), A (K, V, V)
    N, Cin, T, V = 2, 16, 32, 17
    K, Cout = 3, 64

    key = jax.random.PRNGKey(0)
    kx, ka, kw, kb = jax.random.split(key, 4)
    x = jax.random.normal(kx, (N, Cin, T, V), jnp.float32)
    A = 0.3 * jax.random.uniform(ka, (K, V, V), jnp.float32)
    weight = jax.random.normal(kw, (K * Cout, Cin, 1, 1), jnp.float32) / (Cin ** 0.5)
    bias = 0.1 * jax.random.normal(kb, (K * Cout,), jnp.float32)

    out, A_out = gcn_block_forward(x, A, weight, bias)
    out = jax.block_until_ready(out)

    # correctness self-check against the f32 reference (bf16 MXU tolerance)
    ref, _ = gcn_block_reference(x, A, weight, bias)
    ref = jax.block_until_ready(ref)

    assert out.shape == (N, Cout, T, V), out.shape
    assert bool(jnp.all(jnp.isfinite(out)))
    err = float(jnp.max(jnp.abs(out - ref)))
    scale = float(jnp.max(jnp.abs(ref)))
    assert err <= 5e-2 + 5e-2 * scale, (err, scale)

    print("KERNEL_OK")
</pallas_src>

<mosaic_0001>
module attributes {stable_mosaic.version = 11 : i64} {
  func.func @_gcn_fused_kernel(%arg0: i32, %arg1: i32, %arg2: memref<32x272xbf16, #tpu.memory_space<vmem>>, %arg3: memref<272x1152xbf16, #tpu.memory_space<vmem>>, %arg4: memref<1x1152xf32, #tpu.memory_space<vmem>>, %arg5: memref<32x1152xbf16, #tpu.memory_space<vmem>>) attributes {dimension_semantics = [#tpu.dimension_semantics<parallel>, #tpu.dimension_semantics<parallel>], iteration_bounds = array<i64: 2, 1>, scalar_prefetch = 0 : i64, scratch_operands = 0 : i64, tpu.core_type = #tpu.core_type<tc>, window_params = [{transform_indices = @transform_0, window_bounds = array<i64: 32, 272>}, {transform_indices = @transform_1, window_bounds = array<i64: 272, 1152>}, {transform_indices = @transform_2, window_bounds = array<i64: 1, 1152>}, {transform_indices = @transform_3, window_bounds = array<i64: 32, 1152>}]} {
    %c0 = arith.constant 0 : index
    %c0_0 = arith.constant 0 : index
    %0 = vector.load %arg2[%c0, %c0_0] : memref<32x272xbf16, #tpu.memory_space<vmem>>, vector<32x272xbf16>
    %c0_1 = arith.constant 0 : index
    %c0_2 = arith.constant 0 : index
    %1 = vector.load %arg3[%c0_1, %c0_2] : memref<272x1152xbf16, #tpu.memory_space<vmem>>, vector<272x1152xbf16>
    %cst = arith.constant dense<0.000000e+00> : vector<32x1152xf32>
    %2 = tpu.matmul %0, %1, %cst {dimension_numbers = #tpu.dot_dimension_numbers<[1], [0], [0], [1], [0, 0, 1, 1], [], []>} : vector<32x272xbf16>, vector<272x1152xbf16>, vector<32x1152xf32> -> vector<32x1152xf32>
    %c0_3 = arith.constant 0 : index
    %c0_4 = arith.constant 0 : index
    %3 = vector.load %arg4[%c0_3, %c0_4] : memref<1x1152xf32, #tpu.memory_space<vmem>>, vector<1x1152xf32>
    %4 = vector.broadcast %3 : vector<1x1152xf32> to vector<32x1152xf32>
    %5 = arith.addf %2, %4 : vector<32x1152xf32>
    %6 = arith.truncf %5 : vector<32x1152xf32> to vector<32x1152xbf16>
    %c0_5 = arith.constant 0 : index
    %c0_6 = arith.constant 0 : index
    %7 = vector.load %arg5[%c0_5, %c0_6] : memref<32x1152xbf16, #tpu.memory_space<vmem>>, vector<32x1152xbf16>
    tpu.vector_store %arg5[%c0_5, %c0_6], %6 {strides = array<i32>} : memref<32x1152xbf16, #tpu.memory_space<vmem>>, vector<32x1152xbf16>,
    return
  }
  func.func @transform_0(%arg0: i32, %arg1: i32) -> (i32, i32) {
    %c0_i32 = arith.constant 0 : i32
    %c0_i32_0 = arith.constant 0 : i32
    return %arg0, %c0_i32 : i32, i32
  }
  func.func @transform_1(%arg0: i32, %arg1: i32) -> (i32, i32) {
    %c0_i32 = arith.constant 0 : i32
    %c0_i32_0 = arith.constant 0 : i32
    return %c0_i32, %arg1 : i32, i32
  }
  func.func @transform_2(%arg0: i32, %arg1: i32) -> (i32, i32) {
    %c0_i32 = arith.constant 0 : i32
    %c0_i32_0 = arith.constant 0 : i32
    return %c0_i32, %arg1 : i32, i32
  }
  func.func @transform_3(%arg0: i32, %arg1: i32) -> (i32, i32) {
    %c0_i32 = arith.constant 0 : i32
    return %arg0, %arg1 : i32, i32
  }
}

</mosaic_0001>

<llo_original>
// kernel: gcn_block_forward.1
$region0: #{gcn_block_forward.1}
  #allocation0 [shape = 'u32[]', space=smem, size = 0x4, offset = 0x4, fixed_abs, tag = 'smem constant byte address 0x4 - core index']
  #allocation1 [shape = 'u32[144,128]{1,0:T(1,128)}', space=vmem, size = 0x12000, scoped, tag = 'internal scratch']
  %s0 = inlined_call_operand.vmem [shape: bf16[64,272], index: 0, kind: input, shape index: {}]
  %s1 = inlined_call_operand.vmem [shape: bf16[272,1152], index: 1, kind: input, shape index: {}]
  %s2 = inlined_call_operand.vmem [shape: f32[1,1152], index: 2, kind: input, shape index: {}]
  %s3 = inlined_call_operand.vmem [shape: bf16[64,1152], index: 3, kind: output, shape index: {}]
  %s4 = sld [smem:[#allocation0]]
  $region45: #{gcn_block_forward.1} parent=0
    _
  %s6 = ssub.s32 1, %s4
  %s7 = scalar_select 0, %s6, %s4
  loop: start=0, step=1, limit=4
  $region2: #{gcn_block_forward.1} parent=0 // loop_pre_header
    _
  $region3: #{gcn_block_forward.1} parent=0 // loop_header
    %s9 = sphi 0, %s13
    %p10 = scmp.ge.s32.totalorder %s9, 4
    %s16 = sphi 0, %s28
    %s17 = sphi 0, %s24
    %s18 = sphi 0, %s16
    %s19 = sphi 0, %s17
    %s20 = sphi 0, %s18
    %s21 = sphi 0, %s19
    %s31 = sphi 0, %s33
    %s34 = sphi 0, %s31
    %s35 = sphi 0, %s34
    %s51 = sphi 0, %s35
    %s57 = sphi 0, %s59
    %s60 = sphi 0, %s57
    %s61 = sphi 0, %s60
    %s77 = sphi 0, %s61
    %s83 = sphi 0, %s85
    %s86 = sphi 0, %s83
    %s87 = sphi 0, %s86
    %s103 = sphi 0, %s87
    %s111 = sphi 0, %s113
    %s114 = sphi 0, %s111
    %s115 = sphi 0, %s114
    %s131 = sphi 0, %s115
  $region4: #{gcn_block_forward.1} parent=0 // loop_header_branch
    %12 = sbr.rel (%p10) target = $region8
  $region5: #{gcn_block_forward.1} parent=0 // loop_body
    %s14 = ssub.s32 %s9, 1
    %s15 = ssub.s32 %s9, 2
    %s22 = sadd.s32 1, %s17
    %p23 = scmp.ge.s32.totalorder %s22, 1
    %s24 = scalar_select %p23, 0, %s22
    %s25 = sadd.s32 1, %s16
    %s26 = scalar_select %p23, %s25, %s16
    %p27 = scmp.ge.s32.totalorder %s26, 2
    %s28 = scalar_select %p27, 0, %s26
    %s29 = ssub.s32 %s16, %s28
    %p30 = scmp.eq.s32.totalorder %s29, 0
    %s32 = sadd.s32 %s31, 1
    %s33 = scalar_select %p30, %s31, %s32
    %p36 = pneg %p30
    %p37 = scmp.eq.s32.totalorder %s9, 1
    %p38 = por %p36, %p37
    %p39 = scmp.ne.s32.totalorder %s31, %s34
    %p40 = scmp.eq.s32.totalorder %s9, 0
    %p41 = por %p39, %p40
    %p42 = scmp.ne.s32.totalorder %s31, %s34
    %p43 = scmp.eq.s32.totalorder %s14, 1
    %p44 = por %p42, %p43
    %p45 = scmp.ne.s32.totalorder %s34, %s35
    %p46 = scmp.eq.s32.totalorder %s14, 0
    %p47 = por %p45, %p46
    %p48 = scmp.ne.s32.totalorder %s34, %s35
    %p49 = scmp.eq.s32.totalorder %s15, 1
    %p50 = por %p48, %p49
    %p52 = scmp.ne.s32.totalorder %s35, %s51
    %p53 = scmp.eq.s32.totalorder %s15, 0
    %p54 = por %p52, %p53
    %s55 = ssub.s32 %s17, %s24
    %p56 = scmp.eq.s32.totalorder %s55, 0
    %s58 = sadd.s32 %s57, 1
    %s59 = scalar_select %p56, %s57, %s58
    %p62 = pneg %p56
    %p63 = scmp.eq.s32.totalorder %s9, 1
    %p64 = por %p62, %p63
    %p65 = scmp.ne.s32.totalorder %s57, %s60
    %p66 = scmp.eq.s32.totalorder %s9, 0
    %p67 = por %p65, %p66
    %p68 = scmp.ne.s32.totalorder %s57, %s60
    %p69 = scmp.eq.s32.totalorder %s14, 1
    %p70 = por %p68, %p69
    %p71 = scmp.ne.s32.totalorder %s60, %s61
    %p72 = scmp.eq.s32.totalorder %s14, 0
    %p73 = por %p71, %p72
    %p74 = scmp.ne.s32.totalorder %s60, %s61
    %p75 = scmp.eq.s32.totalorder %s15, 1
    %p76 = por %p74, %p75
    %p78 = scmp.ne.s32.totalorder %s61, %s77
    %p79 = scmp.eq.s32.totalorder %s15, 0
    %p80 = por %p78, %p79
    %s81 = ssub.s32 %s17, %s24
    %p82 = scmp.eq.s32.totalorder %s81, 0
    %s84 = sadd.s32 %s83, 1
    %s85 = scalar_select %p82, %s83, %s84
    %p88 = pneg %p82
    %p89 = scmp.eq.s32.totalorder %s9, 1
    %p90 = por %p88, %p89
    %p91 = scmp.ne.s32.totalorder %s83, %s86
    %p92 = scmp.eq.s32.totalorder %s9, 0
    %p93 = por %p91, %p92
    %p94 = scmp.ne.s32.totalorder %s83, %s86
    %p95 = scmp.eq.s32.totalorder %s14, 1
    %p96 = por %p94, %p95
    %p97 = scmp.ne.s32.totalorder %s86, %s87
    %p98 = scmp.eq.s32.totalorder %s14, 0
    %p99 = por %p97, %p98
    %p100 = scmp.ne.s32.totalorder %s86, %s87
    %p101 = scmp.eq.s32.totalorder %s15, 1
    %p102 = por %p100, %p101
    %p104 = scmp.ne.s32.totalorder %s87, %s103
    %p105 = scmp.eq.s32.totalorder %s15, 0
    %p106 = por %p104, %p105
    %s107 = ssub.s32 %s16, %s28
    %s108 = ssub.s32 %s17, %s24
    %s109 = sor.u32 %s107, %s108
    %p110 = scmp.eq.s32.totalorder %s109, 0
    %s112 = sadd.s32 %s111, 1
    %s113 = scalar_select %p110, %s111, %s112
    %p116 = pneg %p110
    %p117 = scmp.eq.s32.totalorder %s9, 1
    %p118 = por %p116, %p117
    %p119 = scmp.ne.s32.totalorder %s111, %s114
    %p120 = scmp.eq.s32.totalorder %s9, 0
    %p121 = por %p119, %p120
    %p122 = scmp.ne.s32.totalorder %s111, %s114
    %p123 = scmp.eq.s32.totalorder %s14, 1
    %p124 = por %p122, %p123
    %p125 = scmp.ne.s32.totalorder %s114, %s115
    %p126 = scmp.eq.s32.totalorder %s14, 0
    %p127 = por %p125, %p126
    %p128 = scmp.ne.s32.totalorder %s114, %s115
    %p129 = scmp.eq.s32.totalorder %s15, 1
    %p130 = por %p128, %p129
    %p132 = scmp.ne.s32.totalorder %s115, %s131
    %p133 = scmp.eq.s32.totalorder %s15, 0
    %p134 = por %p132, %p133
    %p135 = scmp.le.s32.totalorder 1, %s9
    %p136 = scmp.lt.s32.totalorder %s9, 3
    %p137 = pnand %p135, %p136
    %p138 = pneg %p137
    // Predicated region
    $region9: #{gcn_block_forward.1} parent=5 // pred_check
      _
    $region10: #{gcn_block_forward.1} parent=5 // pred_check_branch
      %140 = sbr.rel (%p137) target = $region12
    $region11: #{gcn_block_forward.1} parent=5 // pred_region
      %s141 = ssub.s32 %s9, 1
      // Predicated region
      $region13: #{gcn_block_forward.1} parent=11 // pred_check
        %p142 = pneg %p73
      $region14: #{gcn_block_forward.1} parent=11 // pred_check_branch
        %144 = sbr.rel (%p142) target = $region16
      $region15: #{gcn_block_forward.1} parent=11 // pred_region
        %s145 = smul.u32 9, %s19
        %p146 = scmp.lt.s32.totalorder %s145, 8
        %s147 = scalar_select %p146, %s145, 8
        %s148 = smul.addr %s147, 4
        %s149 = scalar_lea.vmem %s1, %s148
        %s150 = smul.u32 9, %s19
      $region16: #{gcn_block_forward.1} parent=11 // pred_fallthru
        _
      // Predicated region
      $region17: #{gcn_block_forward.1} parent=11 // pred_check
        %p151 = pneg %p99
      $region18: #{gcn_block_forward.1} parent=11 // pred_check_branch
        %153 = sbr.rel (%p151) target = $region20
      $region19: #{gcn_block_forward.1} parent=11 // pred_region
        %s154 = smul.u32 9, %s19
        %p155 = scmp.lt.s32.totalorder %s154, 8
        %s156 = scalar_select %p155, %s154, 8
        %s157 = scalar_lea.vmem %s2, %s156
        %s158 = smul.u32 9, %s19
      $region20: #{gcn_block_forward.1} parent=11 // pred_fallthru
        _
    $region12: #{gcn_block_forward.1} parent=5 // pred_fallthru
      _
    %p159 = scmp.lt.s32.totalorder %s9, 2
    // Predicated region
    $region21: #{gcn_block_forward.1} parent=5 // pred_check
      %p160 = pneg %p159
    $region22: #{gcn_block_forward.1} parent=5 // pred_check_branch
      %162 = sbr.rel (%p160) target = $region24
    $region23: #{gcn_block_forward.1} parent=5 // pred_region
      // Predicated region
      $region25: #{gcn_block_forward.1} parent=23 // pred_check
        %p163 = pneg %p41
      $region26: #{gcn_block_forward.1} parent=23 // pred_check_branch
        %165 = sbr.rel (%p163) target = $region28
      $region27: #{gcn_block_forward.1} parent=23 // pred_region
        %s166 = smul.u32 4, %s16
        %p167 = scmp.lt.s32.totalorder %s166, 7
        %s168 = scalar_select %p167, %s166, 7
        %s169 = smul.addr %s168, 3
        %s170 = smul.addr %s169, 4
        %s171 = scalar_lea.vmem %s0, %s170
        %s172 = smul.u32 4, %s16
      $region28: #{gcn_block_forward.1} parent=23 // pred_fallthru
        _
    $region24: #{gcn_block_forward.1} parent=5 // pred_fallthru
      _
    %p173 = scmp.le.s32.totalorder 1, %s9
    %p174 = scmp.lt.s32.totalorder %s9, 3
    %p175 = pnand %p173, %p174
    %p176 = pneg %p175
    // Predicated region
    $region29: #{gcn_block_forward.1} parent=5 // pred_check
      _
    $region30: #{gcn_block_forward.1} parent=5 // pred_check_branch
      %178 = sbr.rel (%p175) target = $region32
    $region31: #{gcn_block_forward.1} parent=5 // pred_region
      %s179 = ssub.s32 %s9, 1
      %s180 = smul.u32 4, %s18
      %p181 = scmp.lt.s32.totalorder %s180, 7
      %s182 = scalar_select %p181, %s180, 7
      %s183 = smul.addr %s182, 3
      %s184 = smul.addr %s183, 4
      %s185 = scalar_lea.vmem %s0, %s184
      %p186 = pneg %p47
      %p187 = pneg %p44
      %s188 = smul.u32 9, %s19
      %p189 = scmp.lt.s32.totalorder %s188, 8
      %s190 = scalar_select %p189, %s188, 8
      %s191 = smul.addr %s190, 4
      %s192 = scalar_lea.vmem %s1, %s191
      %p193 = pneg %p73
      %p194 = pneg %p70
      %s195 = smul.u32 9, %s19
      %p196 = scmp.lt.s32.totalorder %s195, 8
      %s197 = scalar_select %p196, %s195, 8
      %s198 = scalar_lea.vmem %s2, %s197
      %p199 = pneg %p99
      %p200 = pneg %p96
      %p201 = pneg %p127
      %p202 = pneg %p124
      %s203 = smul.u32 4, %s18
      %s204 = smul.u32 9, %s19
      %p205 = scmp.lt.s32.totalorder %s203, 7
      %s206 = scalar_select %p205, %s203, 7
      %p207 = scmp.lt.s32.totalorder %s204, 8
      %s208 = scalar_select %p207, %s204, 8
      %s209 = smul.addr %s206, 9
      %s210 = sadd.s32 %s208, %s209
      %s211 = smul.addr %s210, 4
      %s212 = scalar_lea.vmem %s3, %s211
      %s213 = smul.u32 4, %s18
      %p214 = scmp.lt.s32.totalorder %s213, 7
      %s215 = scalar_select %p214, %s213, 7
      %s216 = smul.addr %s215, 3
      %s217 = smul.addr %s216, 4
      %s218 = scalar_lea.vmem %s0, %s217
      %s219 = smul.u32 4, %s18
      %s220 = smul.u32 9, %s19
      %p221 = scmp.lt.s32.totalorder %s220, 8
      %s222 = scalar_select %p221, %s220, 8
      %s223 = smul.addr %s222, 4
      %s224 = scalar_lea.vmem %s1, %s223
      %s225 = smul.u32 9, %s19
      %s226 = smul.u32 9, %s19
      %p227 = scmp.lt.s32.totalorder %s226, 8
      %s228 = scalar_select %p227, %s226, 8
      %s229 = scalar_lea.vmem %s2, %s228
      %s230 = smul.u32 9, %s19
      %s231 = smul.u32 4, %s18
      %s232 = smul.u32 9, %s19
      %p233 = scmp.lt.s32.totalorder %s231, 7
      %s234 = scalar_select %p233, %s231, 7
      %p235 = scmp.lt.s32.totalorder %s232, 8
      %s236 = scalar_select %p235, %s232, 8
      %s237 = smul.addr %s234, 9
      %s238 = sadd.s32 %s236, %s237
      %s239 = smul.addr %s238, 4
      %s240 = scalar_lea.vmem %s3, %s239
      %s241 = smul.u32 4, %s18
      %s242 = smul.u32 9, %s19
      %v244 = vld [vmem:[%s218] sm:$0xff]
      %v245 = vld [vmem:[%s218 + $0x8] sm:$0xf]
      %v246 = vld [vmem:[%s218 + $0xc] sm:$0xff]
      %v247 = vld [vmem:[%s218 + $0x14] sm:$0xf]
      %v248 = vld [vmem:[%s218 + $0x18] sm:$0xff]
      %v249 = vld [vmem:[%s218 + $0x20] sm:$0xf]
      %v250 = vld [vmem:[%s218 + $0x24] sm:$0xff]
      %v251 = vld [vmem:[%s218 + $0x2c] sm:$0xf]
      %v252 = vld [vmem:[%s224] sm:$0xff]
      %v253 = vld [vmem:[%s224 + $0x8] sm:$0xff]
      %v254 = vld [vmem:[%s224 + $0x10] sm:$0xff]
      %v255 = vld [vmem:[%s224 + $0x18] sm:$0xff]
      %v256 = vld [vmem:[%s224 + $0x20] sm:$0xf]
      %v257 = vld [vmem:[%s224 + $0x24] sm:$0xff]
      %v258 = vld [vmem:[%s224 + $0x2c] sm:$0xff]
      %v259 = vld [vmem:[%s224 + $0x34] sm:$0xff]
      %v260 = vld [vmem:[%s224 + $0x3c] sm:$0xff]
      %v261 = vld [vmem:[%s224 + $0x44] sm:$0xf]
      %v262 = vld [vmem:[%s224 + $0x48] sm:$0xff]
      %v263 = vld [vmem:[%s224 + $0x50] sm:$0xff]
      %v264 = vld [vmem:[%s224 + $0x58] sm:$0xff]
      %v265 = vld [vmem:[%s224 + $0x60] sm:$0xff]
      %v266 = vld [vmem:[%s224 + $0x68] sm:$0xf]
      %v267 = vld [vmem:[%s224 + $0x6c] sm:$0xff]
      %v268 = vld [vmem:[%s224 + $0x74] sm:$0xff]
      %v269 = vld [vmem:[%s224 + $0x7c] sm:$0xff]
      %v270 = vld [vmem:[%s224 + $0x84] sm:$0xff]
      %v271 = vld [vmem:[%s224 + $0x8c] sm:$0xf]
      %v272 = vld [vmem:[%s224 + $0x90] sm:$0xff]
      %v273 = vld [vmem:[%s224 + $0x98] sm:$0xff]
      %v274 = vld [vmem:[%s224 + $0xa0] sm:$0xff]
      %v275 = vld [vmem:[%s224 + $0xa8] sm:$0xff]
      %v276 = vld [vmem:[%s224 + $0xb0] sm:$0xf]
      %v277 = vld [vmem:[%s224 + $0xb4] sm:$0xff]
      %v278 = vld [vmem:[%s224 + $0xbc] sm:$0xff]
      %v279 = vld [vmem:[%s224 + $0xc4] sm:$0xff]
      %v280 = vld [vmem:[%s224 + $0xcc] sm:$0xff]
      %v281 = vld [vmem:[%s224 + $0xd4] sm:$0xf]
      %v282 = vld [vmem:[%s224 + $0xd8] sm:$0xff]
      %v283 = vld [vmem:[%s224 + $0xe0] sm:$0xff]
      %v284 = vld [vmem:[%s224 + $0xe8] sm:$0xff]
      %v285 = vld [vmem:[%s224 + $0xf0] sm:$0xff]
      %v286 = vld [vmem:[%s224 + $0xf8] sm:$0xf]
      %v287 = vld [vmem:[%s224 + $0xfc] sm:$0xff]
      %v288 = vld [vmem:[%s224 + $0x104] sm:$0xff]
      %v289 = vld [vmem:[%s224 + $0x10c] sm:$0xff]
      %v290 = vld [vmem:[%s224 + $0x114] sm:$0xff]
      %v291 = vld [vmem:[%s224 + $0x11c] sm:$0xf]
      %v292 = vld [vmem:[%s224 + $0x120] sm:$0xff]
      %v293 = vld [vmem:[%s224 + $0x128] sm:$0xff]
      %v294 = vld [vmem:[%s224 + $0x130] sm:$0xff]
      %v295 = vld [vmem:[%s224 + $0x138] sm:$0xff]
      %v296 = vld [vmem:[%s224 + $0x140] sm:$0xf]
      %v297 = vld [vmem:[%s224 + $0x144] sm:$0xff]
      %v298 = vld [vmem:[%s224 + $0x14c] sm:$0xff]
      %v299 = vld [vmem:[%s224 + $0x154] sm:$0xff]
      %v300 = vld [vmem:[%s224 + $0x15c] sm:$0xff]
      %v301 = vld [vmem:[%s224 + $0x164] sm:$0xf]
      %v302 = vld [vmem:[%s224 + $0x168] sm:$0xff]
      %v303 = vld [vmem:[%s224 + $0x170] sm:$0xff]
      %v304 = vld [vmem:[%s224 + $0x178] sm:$0xff]
      %v305 = vld [vmem:[%s224 + $0x180] sm:$0xff]
      %v306 = vld [vmem:[%s224 + $0x188] sm:$0xf]
      %v307 = vld [vmem:[%s224 + $0x18c] sm:$0xff]
      %v308 = vld [vmem:[%s224 + $0x194] sm:$0xff]
      %v309 = vld [vmem:[%s224 + $0x19c] sm:$0xff]
      %v310 = vld [vmem:[%s224 + $0x1a4] sm:$0xff]
      %v311 = vld [vmem:[%s224 + $0x1ac] sm:$0xf]
      %v312 = vld [vmem:[%s224 + $0x1b0] sm:$0xff]
      %v313 = vld [vmem:[%s224 + $0x1b8] sm:$0xff]
      %v314 = vld [vmem:[%s224 + $0x1c0] sm:$0xff]
      %v315 = vld [vmem:[%s224 + $0x1c8] sm:$0xff]
      %v316 = vld [vmem:[%s224 + $0x1d0] sm:$0xf]
      %v317 = vld [vmem:[%s224 + $0x1d4] sm:$0xff]
      %v318 = vld [vmem:[%s224 + $0x1dc] sm:$0xff]
      %v319 = vld [vmem:[%s224 + $0x1e4] sm:$0xff]
      %v320 = vld [vmem:[%s224 + $0x1ec] sm:$0xff]
      %v321 = vld [vmem:[%s224 + $0x1f4] sm:$0xf]
      %v322 = vld [vmem:[%s224 + $0x1f8] sm:$0xff]
      %v323 = vld [vmem:[%s224 + $0x200] sm:$0xff]
      %v324 = vld [vmem:[%s224 + $0x208] sm:$0xff]
      %v325 = vld [vmem:[%s224 + $0x210] sm:$0xff]
      %v326 = vld [vmem:[%s224 + $0x218] sm:$0xf]
      %v327 = vld [vmem:[%s224 + $0x21c] sm:$0xff]
      %v328 = vld [vmem:[%s224 + $0x224] sm:$0xff]
      %v329 = vld [vmem:[%s224 + $0x22c] sm:$0xff]
      %v330 = vld [vmem:[%s224 + $0x234] sm:$0xff]
      %v331 = vld [vmem:[%s224 + $0x23c] sm:$0xf]
      %v332 = vld [vmem:[%s224 + $0x240] sm:$0xff]
      %v333 = vld [vmem:[%s224 + $0x248] sm:$0xff]
      %v334 = vld [vmem:[%s224 + $0x250] sm:$0xff]
      %v335 = vld [vmem:[%s224 + $0x258] sm:$0xff]
      %v336 = vld [vmem:[%s224 + $0x260] sm:$0xf]
      %v337 = vld [vmem:[%s224 + $0x264] sm:$0xff]
      %v338 = vld [vmem:[%s224 + $0x26c] sm:$0xff]
      %v339 = vld [vmem:[%s224 + $0x274] sm:$0xff]
      %v340 = vld [vmem:[%s224 + $0x27c] sm:$0xff]
      %v341 = vld [vmem:[%s224 + $0x284] sm:$0xf]
      %v342 = vld [vmem:[%s224 + $0x288] sm:$0xff]
      %v343 = vld [vmem:[%s224 + $0x290] sm:$0xff]
      %v344 = vld [vmem:[%s224 + $0x298] sm:$0xff]
      %v345 = vld [vmem:[%s224 + $0x2a0] sm:$0xff]
      %v346 = vld [vmem:[%s224 + $0x2a8] sm:$0xf]
      %v347 = vld [vmem:[%s224 + $0x2ac] sm:$0xff]
      %v348 = vld [vmem:[%s224 + $0x2b4] sm:$0xff]
      %v349 = vld [vmem:[%s224 + $0x2bc] sm:$0xff]
      %v350 = vld [vmem:[%s224 + $0x2c4] sm:$0xff]
      %v351 = vld [vmem:[%s224 + $0x2cc] sm:$0xf]
      %v352 = vld [vmem:[%s224 + $0x2d0] sm:$0xff]
      %v353 = vld [vmem:[%s224 + $0x2d8] sm:$0xff]
      %v354 = vld [vmem:[%s224 + $0x2e0] sm:$0xff]
      %v355 = vld [vmem:[%s224 + $0x2e8] sm:$0xff]
      %v356 = vld [vmem:[%s224 + $0x2f0] sm:$0xf]
      %v357 = vld [vmem:[%s224 + $0x2f4] sm:$0xff]
      %v358 = vld [vmem:[%s224 + $0x2fc] sm:$0xff]
      %v359 = vld [vmem:[%s224 + $0x304] sm:$0xff]
      %v360 = vld [vmem:[%s224 + $0x30c] sm:$0xff]
      %v361 = vld [vmem:[%s224 + $0x314] sm:$0xf]
      %v362 = vld [vmem:[%s224 + $0x318] sm:$0xff]
      %v363 = vld [vmem:[%s224 + $0x320] sm:$0xff]
      %v364 = vld [vmem:[%s224 + $0x328] sm:$0xff]
      %v365 = vld [vmem:[%s224 + $0x330] sm:$0xff]
      %v366 = vld [vmem:[%s224 + $0x338] sm:$0xf]
      %v367 = vld [vmem:[%s224 + $0x33c] sm:$0xff]
      %v368 = vld [vmem:[%s224 + $0x344] sm:$0xff]
      %v369 = vld [vmem:[%s224 + $0x34c] sm:$0xff]
      %v370 = vld [vmem:[%s224 + $0x354] sm:$0xff]
      %v371 = vld [vmem:[%s224 + $0x35c] sm:$0xf]
      %v372 = vld [vmem:[%s224 + $0x360] sm:$0xff]
      %v373 = vld [vmem:[%s224 + $0x368] sm:$0xff]
      %v374 = vld [vmem:[%s224 + $0x370] sm:$0xff]
      %v375 = vld [vmem:[%s224 + $0x378] sm:$0xff]
      %v376 = vld [vmem:[%s224 + $0x380] sm:$0xf]
      %v377 = vld [vmem:[%s224 + $0x384] sm:$0xff]
      %v378 = vld [vmem:[%s224 + $0x38c] sm:$0xff]
      %v379 = vld [vmem:[%s224 + $0x394] sm:$0xff]
      %v380 = vld [vmem:[%s224 + $0x39c] sm:$0xff]
      %v381 = vld [vmem:[%s224 + $0x3a4] sm:$0xf]
      %v382 = vld [vmem:[%s224 + $0x3a8] sm:$0xff]
      %v383 = vld [vmem:[%s224 + $0x3b0] sm:$0xff]
      %v384 = vld [vmem:[%s224 + $0x3b8] sm:$0xff]
      %v385 = vld [vmem:[%s224 + $0x3c0] sm:$0xff]
      %v386 = vld [vmem:[%s224 + $0x3c8] sm:$0xf]
      %v387 = vld [vmem:[%s224 + $0x3cc] sm:$0xff]
      %v388 = vld [vmem:[%s224 + $0x3d4] sm:$0xff]
      %v389 = vld [vmem:[%s224 + $0x3dc] sm:$0xff]
      %v390 = vld [vmem:[%s224 + $0x3e4] sm:$0xff]
      %v391 = vld [vmem:[%s224 + $0x3ec] sm:$0xf]
      %v392 = vld [vmem:[%s224 + $0x3f0] sm:$0xff]
      %v393 = vld [vmem:[%s224 + $0x3f8] sm:$0xff]
      %v394 = vld [vmem:[%s224 + $0x400] sm:$0xff]
      %v395 = vld [vmem:[%s224 + $0x408] sm:$0xff]
      %v396 = vld [vmem:[%s224 + $0x410] sm:$0xf]
      %v397 = vld [vmem:[%s224 + $0x414] sm:$0xff]
      %v398 = vld [vmem:[%s224 + $0x41c] sm:$0xff]
      %v399 = vld [vmem:[%s224 + $0x424] sm:$0xff]
      %v400 = vld [vmem:[%s224 + $0x42c] sm:$0xff]
      %v401 = vld [vmem:[%s224 + $0x434] sm:$0xf]
      %v402 = vld [vmem:[%s224 + $0x438] sm:$0xff]
      %v403 = vld [vmem:[%s224 + $0x440] sm:$0xff]
      %v404 = vld [vmem:[%s224 + $0x448] sm:$0xff]
      %v405 = vld [vmem:[%s224 + $0x450] sm:$0xff]
      %v406 = vld [vmem:[%s224 + $0x458] sm:$0xf]
      %v407 = vld [vmem:[%s224 + $0x45c] sm:$0xff]
      %v408 = vld [vmem:[%s224 + $0x464] sm:$0xff]
      %v409 = vld [vmem:[%s224 + $0x46c] sm:$0xff]
      %v410 = vld [vmem:[%s224 + $0x474] sm:$0xff]
      %v411 = vld [vmem:[%s224 + $0x47c] sm:$0xf]
      %v412 = vld [vmem:[%s224 + $0x480] sm:$0xff]
      %v413 = vld [vmem:[%s224 + $0x488] sm:$0xff]
      %v414 = vld [vmem:[%s224 + $0x490] sm:$0xff]
      %v415 = vld [vmem:[%s224 + $0x498] sm:$0xff]
      %v416 = vld [vmem:[%s224 + $0x4a0] sm:$0xf]
      %v417 = vld [vmem:[%s224 + $0x4a4] sm:$0xff]
      %v418 = vld [vmem:[%s224 + $0x4ac] sm:$0xff]
      %v419 = vld [vmem:[%s224 + $0x4b4] sm:$0xff]
      %v420 = vld [vmem:[%s224 + $0x4bc] sm:$0xff]
      %v421 = vld [vmem:[%s224 + $0x4c4] sm:$0xf]
      %v422 = vld [vmem:[%s229] sm:$0xff]
      %v423 = vld [vmem:[%s229 + $0x8] sm:$0x1]
      %v426 = vlaneseq
      %v427 = vshrl.u32 %v426, 7
      %v428 = vsub.s32 0, %v427
      %v429 = vrot.slane %v422, %v428
      %v430 = vlaneseq
      %v431 = vshrl.u32 %v430, 7
      %v432 = vsub.s32 1, %v431
      %v433 = vrot.slane %v422, %v432
      %v434 = vlaneseq
      %v435 = vshrl.u32 %v434, 7
      %v436 = vsub.s32 2, %v435
      %v437 = vrot.slane %v422, %v436
      %v438 = vlaneseq
      %v439 = vshrl.u32 %v438, 7
      %v440 = vsub.s32 3, %v439
      %v441 = vrot.slane %v422, %v440
      %v442 = vlaneseq
      %v443 = vshrl.u32 %v442, 7
      %v444 = vsub.s32 4, %v443
      %v445 = vrot.slane %v422, %v444
      %v446 = vlaneseq
      %v447 = vshrl.u32 %v446, 7
      %v448 = vsub.s32 5, %v447
      %v449 = vrot.slane %v422, %v448
      %v450 = vlaneseq
      %v451 = vshrl.u32 %v450, 7
      %v452 = vsub.s32 6, %v451
      %v453 = vrot.slane %v422, %v452
      %v454 = vlaneseq
      %v455 = vshrl.u32 %v454, 7
      %v456 = vsub.s32 7, %v455
      %v457 = vrot.slane %v422, %v456
      %v458 = vlaneseq
      %v459 = vshrl.u32 %v458, 7
      %v460 = vsub.s32 0, %v459
      %v461 = vrot.slane %v423, %v460
      %v479 = vunpack.c.l.b16 %v244
      %v480 = vunpack.c.h.b16 %v244
      %v481 = vunpack.c.l.b16 %v245
      %v482 = vunpack.c.l.b16 %v246
      %v483 = vunpack.c.h.b16 %v246
      %v484 = vunpack.c.l.b16 %v247
      %v485 = vunpack.c.l.b16 %v248
      %v486 = vunpack.c.h.b16 %v248
      %v487 = vunpack.c.l.b16 %v249
      %v488 = vunpack.c.l.b16 %v250
      %v489 = vunpack.c.h.b16 %v250
      %v490 = vunpack.c.l.b16 %v251
      %v491 = vpack.c.b16 %v482, %v479
      %v492 = vpack.c.b16 %v483, %v480
      %v493 = vpack.c.b16 %v484, %v481
      %v494 = vpack.c.b16 %v488, %v485
      %v495 = vpack.c.b16 %v489, %v486
      %v496 = vpack.c.b16 %v490, %v487
      %v671 = vunpack.c.l.b16 %v252
      %v672 = vunpack.c.h.b16 %v252
      %v673 = vunpack.c.l.b16 %v253
      %v674 = vunpack.c.h.b16 %v253
      %v675 = vunpack.c.l.b16 %v254
      %v676 = vunpack.c.h.b16 %v254
      %v677 = vunpack.c.l.b16 %v255
      %v678 = vunpack.c.h.b16 %v255
      %v679 = vunpack.c.l.b16 %v256
      %v680 = vunpack.c.l.b16 %v257
      %v681 = vunpack.c.h.b16 %v257
      %v682 = vunpack.c.l.b16 %v258
      %v683 = vunpack.c.h.b16 %v258
      %v684 = vunpack.c.l.b16 %v259
      %v685 = vunpack.c.h.b16 %v259
      %v686 = vunpack.c.l.b16 %v260
      %v687 = vunpack.c.h.b16 %v260
      %v688 = vunpack.c.l.b16 %v261
      %v689 = vunpack.c.l.b16 %v262
      %v690 = vunpack.c.h.b16 %v262
      %v691 = vunpack.c.l.b16 %v263
      %v692 = vunpack.c.h.b16 %v263
      %v693 = vunpack.c.l.b16 %v264
      %v694 = vunpack.c.h.b16 %v264
      %v695 = vunpack.c.l.b16 %v265
      %v696 = vunpack.c.h.b16 %v265
      %v697 = vunpack.c.l.b16 %v266
      %v698 = vunpack.c.l.b16 %v267
      %v699 = vunpack.c.h.b16 %v267
      %v700 = vunpack.c.l.b16 %v268
      %v701 = vunpack.c.h.b16 %v268
      %v702 = vunpack.c.l.b16 %v269
      %v703 = vunpack.c.h.b16 %v269
      %v704 = vunpack.c.l.b16 %v270
      %v705 = vunpack.c.h.b16 %v270
      %v706 = vunpack.c.l.b16 %v271
      %v707 = vunpack.c.l.b16 %v272
      %v708 = vunpack.c.h.b16 %v272
      %v709 = vunpack.c.l.b16 %v273
      %v710 = vunpack.c.h.b16 %v273
      %v711 = vunpack.c.l.b16 %v274
      %v712 = vunpack.c.h.b16 %v274
      %v713 = vunpack.c.l.b16 %v275
      %v714 = vunpack.c.h.b16 %v275
      %v715 = vunpack.c.l.b16 %v276
      %v716 = vunpack.c.l.b16 %v277
      %v717 = vunpack.c.h.b16 %v277
      %v718 = vunpack.c.l.b16 %v278
      %v719 = vunpack.c.h.b16 %v278
      %v720 = vunpack.c.l.b16 %v279
      %v721 = vunpack.c.h.b16 %v279
      %v722 = vunpack.c.l.b16 %v280
      %v723 = vunpack.c.h.b16 %v280
      %v724 = vunpack.c.l.b16 %v281
      %v725 = vunpack.c.l.b16 %v282
      %v726 = vunpack.c.h.b16 %v282
      %v727 = vunpack.c.l.b16 %v283
      %v728 = vunpack.c.h.b16 %v283
      %v729 = vunpack.c.l.b16 %v284
      %v730 = vunpack.c.h.b16 %v284
      %v731 = vunpack.c.l.b16 %v285
      %v732 = vunpack.c.h.b16 %v285
      %v733 = vunpack.c.l.b16 %v286
      %v734 = vunpack.c.l.b16 %v287
      %v735 = vunpack.c.h.b16 %v287
      %v736 = vunpack.c.l.b16 %v288
      %v737 = vunpack.c.h.b16 %v288
      %v738 = vunpack.c.l.b16 %v289
      %v739 = vunpack.c.h.b16 %v289
      %v740 = vunpack.c.l.b16 %v290
      %v741 = vunpack.c.h.b16 %v290
      %v742 = vunpack.c.l.b16 %v291
      %v743 = vunpack.c.l.b16 %v292
      %v744 = vunpack.c.h.b16 %v292
      %v745 = vunpack.c.l.b16 %v293
      %v746 = vunpack.c.h.b16 %v293
      %v747 = vunpack.c.l.b16 %v294
      %v748 = vunpack.c.h.b16 %v294
      %v749 = vunpack.c.l.b16 %v295
      %v750 = vunpack.c.h.b16 %v295
      %v751 = vunpack.c.l.b16 %v296
      %v752 = vunpack.c.l.b16 %v297
      %v753 = vunpack.c.h.b16 %v297
      %v754 = vunpack.c.l.b16 %v298
      %v755 = vunpack.c.h.b16 %v298
      %v756 = vunpack.c.l.b16 %v299
      %v757 = vunpack.c.h.b16 %v299
      %v758 = vunpack.c.l.b16 %v300
      %v759 = vunpack.c.h.b16 %v300
      %v760 = vunpack.c.l.b16 %v301
      %v761 = vunpack.c.l.b16 %v302
      %v762 = vunpack.c.h.b16 %v302
      %v763 = vunpack.c.l.b16 %v303
      %v764 = vunpack.c.h.b16 %v303
      %v765 = vunpack.c.l.b16 %v304
      %v766 = vunpack.c.h.b16 %v304
      %v767 = vunpack.c.l.b16 %v305
      %v768 = vunpack.c.h.b16 %v305
      %v769 = vunpack.c.l.b16 %v306
      %v770 = vunpack.c.l.b16 %v307
      %v771 = vunpack.c.h.b16 %v307
      %v772 = vunpack.c.l.b16 %v308
      %v773 = vunpack.c.h.b16 %v308
      %v774 = vunpack.c.l.b16 %v309
      %v775 = vunpack.c.h.b16 %v309
      %v776 = vunpack.c.l.b16 %v310
      %v777 = vunpack.c.h.b16 %v310
      %v778 = vunpack.c.l.b16 %v311
      %v779 = vunpack.c.l.b16 %v312
      %v780 = vunpack.c.h.b16 %v312
      %v781 = vunpack.c.l.b16 %v313
      %v782 = vunpack.c.h.b16 %v313
      %v783 = vunpack.c.l.b16 %v314
      %v784 = vunpack.c.h.b16 %v314
      %v785 = vunpack.c.l.b16 %v315
      %v786 = vunpack.c.h.b16 %v315
      %v787 = vunpack.c.l.b16 %v316
      %v788 = vunpack.c.l.b16 %v317
      %v789 = vunpack.c.h.b16 %v317
      %v790 = vunpack.c.l.b16 %v318
      %v791 = vunpack.c.h.b16 %v318
      %v792 = vunpack.c.l.b16 %v319
      %v793 = vunpack.c.h.b16 %v319
      %v794 = vunpack.c.l.b16 %v320
      %v795 = vunpack.c.h.b16 %v320
      %v796 = vunpack.c.l.b16 %v321
      %v797 = vunpack.c.l.b16 %v322
      %v798 = vunpack.c.h.b16 %v322
      %v799 = vunpack.c.l.b16 %v323
      %v800 = vunpack.c.h.b16 %v323
      %v801 = vunpack.c.l.b16 %v324
      %v802 = vunpack.c.h.b16 %v324
      %v803 = vunpack.c.l.b16 %v325
      %v804 = vunpack.c.h.b16 %v325
      %v805 = vunpack.c.l.b16 %v326
      %v806 = vunpack.c.l.b16 %v327
      %v807 = vunpack.c.h.b16 %v327
      %v808 = vunpack.c.l.b16 %v328
      %v809 = vunpack.c.h.b16 %v328
      %v810 = vunpack.c.l.b16 %v329
      %v811 = vunpack.c.h.b16 %v329
      %v812 = vunpack.c.l.b16 %v330
      %v813 = vunpack.c.h.b16 %v330
      %v814 = vunpack.c.l.b16 %v331
      %v815 = vunpack.c.l.b16 %v332
      %v816 = vunpack.c.h.b16 %v332
      %v817 = vunpack.c.l.b16 %v333
      %v818 = vunpack.c.h.b16 %v333
      %v819 = vunpack.c.l.b16 %v334
      %v820 = vunpack.c.h.b16 %v334
      %v821 = vunpack.c.l.b16 %v335
      %v822 = vunpack.c.h.b16 %v335
      %v823 = vunpack.c.l.b16 %v336
      %v824 = vunpack.c.l.b16 %v337
      %v825 = vunpack.c.h.b16 %v337
      %v826 = vunpack.c.l.b16 %v338
      %v827 = vunpack.c.h.b16 %v338
      %v828 = vunpack.c.l.b16 %v339
      %v829 = vunpack.c.h.b16 %v339
      %v830 = vunpack.c.l.b16 %v340
      %v831 = vunpack.c.h.b16 %v340
      %v832 = vunpack.c.l.b16 %v341
      %v833 = vunpack.c.l.b16 %v342
      %v834 = vunpack.c.h.b16 %v342
      %v835 = vunpack.c.l.b16 %v343
      %v836 = vunpack.c.h.b16 %v343
      %v837 = vunpack.c.l.b16 %v344
      %v838 = vunpack.c.h.b16 %v344
      %v839 = vunpack.c.l.b16 %v345
      %v840 = vunpack.c.h.b16 %v345
      %v841 = vunpack.c.l.b16 %v346
      %v842 = vunpack.c.l.b16 %v347
      %v843 = vunpack.c.h.b16 %v347
      %v844 = vunpack.c.l.b16 %v348
      %v845 = vunpack.c.h.b16 %v348
      %v846 = vunpack.c.l.b16 %v349
      %v847 = vunpack.c.h.b16 %v349
      %v848 = vunpack.c.l.b16 %v350
      %v849 = vunpack.c.h.b16 %v350
      %v850 = vunpack.c.l.b16 %v351
      %v851 = vunpack.c.l.b16 %v352
      %v852 = vunpack.c.h.b16 %v352
      %v853 = vunpack.c.l.b16 %v353
      %v854 = vunpack.c.h.b16 %v353
      %v855 = vunpack.c.l.b16 %v354
      %v856 = vunpack.c.h.b16 %v354
      %v857 = vunpack.c.l.b16 %v355
      %v858 = vunpack.c.h.b16 %v355
      %v859 = vunpack.c.l.b16 %v356
      %v860 = vunpack.c.l.b16 %v357
      %v861 = vunpack.c.h.b16 %v357
      %v862 = vunpack.c.l.b16 %v358
      %v863 = vunpack.c.h.b16 %v358
      %v864 = vunpack.c.l.b16 %v359
      %v865 = vunpack.c.h.b16 %v359
      %v866 = vunpack.c.l.b16 %v360
      %v867 = vunpack.c.h.b16 %v360
      %v868 = vunpack.c.l.b16 %v361
      %v869 = vunpack.c.l.b16 %v362
      %v870 = vunpack.c.h.b16 %v362
      %v871 = vunpack.c.l.b16 %v363
      %v872 = vunpack.c.h.b16 %v363
      %v873 = vunpack.c.l.b16 %v364
      %v874 = vunpack.c.h.b16 %v364
      %v875 = vunpack.c.l.b16 %v365
      %v876 = vunpack.c.h.b16 %v365
      %v877 = vunpack.c.l.b16 %v366
      %v878 = vunpack.c.l.b16 %v367
      %v879 = vunpack.c.h.b16 %v367
      %v880 = vunpack.c.l.b16 %v368
      %v881 = vunpack.c.h.b16 %v368
      %v882 = vunpack.c.l.b16 %v369
      %v883 = vunpack.c.h.b16 %v369
      %v884 = vunpack.c.l.b16 %v370
      %v885 = vunpack.c.h.b16 %v370
      %v886 = vunpack.c.l.b16 %v371
      %v887 = vunpack.c.l.b16 %v372
      %v888 = vunpack.c.h.b16 %v372
      %v889 = vunpack.c.l.b16 %v373
      %v890 = vunpack.c.h.b16 %v373
      %v891 = vunpack.c.l.b16 %v374
      %v892 = vunpack.c.h.b16 %v374
      %v893 = vunpack.c.l.b16 %v375
      %v894 = vunpack.c.h.b16 %v375
      %v895 = vunpack.c.l.b16 %v376
      %v896 = vunpack.c.l.b16 %v377
      %v897 = vunpack.c.h.b16 %v377
      %v898 = vunpack.c.l.b16 %v378
      %v899 = vunpack.c.h.b16 %v378
      %v900 = vunpack.c.l.b16 %v379
      %v901 = vunpack.c.h.b16 %v379
      %v902 = vunpack.c.l.b16 %v380
      %v903 = vunpack.c.h.b16 %v380
      %v904 = vunpack.c.l.b16 %v381
      %v905 = vunpack.c.l.b16 %v382
      %v906 = vunpack.c.h.b16 %v382
      %v907 = vunpack.c.l.b16 %v383
      %v908 = vunpack.c.h.b16 %v383
      %v909 = vunpack.c.l.b16 %v384
      %v910 = vunpack.c.h.b16 %v384
      %v911 = vunpack.c.l.b16 %v385
      %v912 = vunpack.c.h.b16 %v385
      %v913 = vunpack.c.l.b16 %v386
      %v914 = vunpack.c.l.b16 %v387
      %v915 = vunpack.c.h.b16 %v387
      %v916 = vunpack.c.l.b16 %v388
      %v917 = vunpack.c.h.b16 %v388
      %v918 = vunpack.c.l.b16 %v389
      %v919 = vunpack.c.h.b16 %v389
      %v920 = vunpack.c.l.b16 %v390
      %v921 = vunpack.c.h.b16 %v390
      %v922 = vunpack.c.l.b16 %v391
      %v923 = vunpack.c.l.b16 %v392
      %v924 = vunpack.c.h.b16 %v392
      %v925 = vunpack.c.l.b16 %v393
      %v926 = vunpack.c.h.b16 %v393
      %v927 = vunpack.c.l.b16 %v394
      %v928 = vunpack.c.h.b16 %v394
      %v929 = vunpack.c.l.b16 %v395
      %v930 = vunpack.c.h.b16 %v395
      %v931 = vunpack.c.l.b16 %v396
      %v932 = vunpack.c.l.b16 %v397
      %v933 = vunpack.c.h.b16 %v397
      %v934 = vunpack.c.l.b16 %v398
      %v935 = vunpack.c.h.b16 %v398
      %v936 = vunpack.c.l.b16 %v399
      %v937 = vunpack.c.h.b16 %v399
      %v938 = vunpack.c.l.b16 %v400
      %v939 = vunpack.c.h.b16 %v400
      %v940 = vunpack.c.l.b16 %v401
      %v941 = vunpack.c.l.b16 %v402
      %v942 = vunpack.c.h.b16 %v402
      %v943 = vunpack.c.l.b16 %v403
      %v944 = vunpack.c.h.b16 %v403
      %v945 = vunpack.c.l.b16 %v404
      %v946 = vunpack.c.h.b16 %v404
      %v947 = vunpack.c.l.b16 %v405
      %v948 = vunpack.c.h.b16 %v405
      %v949 = vunpack.c.l.b16 %v406
      %v950 = vunpack.c.l.b16 %v407
      %v951 = vunpack.c.h.b16 %v407
      %v952 = vunpack.c.l.b16 %v408
      %v953 = vunpack.c.h.b16 %v408
      %v954 = vunpack.c.l.b16 %v409
      %v955 = vunpack.c.h.b16 %v409
      %v956 = vunpack.c.l.b16 %v410
      %v957 = vunpack.c.h.b16 %v410
      %v958 = vunpack.c.l.b16 %v411
      %v959 = vunpack.c.l.b16 %v412
      %v960 = vunpack.c.h.b16 %v412
      %v961 = vunpack.c.l.b16 %v413
      %v962 = vunpack.c.h.b16 %v413
      %v963 = vunpack.c.l.b16 %v414
      %v964 = vunpack.c.h.b16 %v414
      %v965 = vunpack.c.l.b16 %v415
      %v966 = vunpack.c.h.b16 %v415
      %v967 = vunpack.c.l.b16 %v416
      %v968 = vunpack.c.l.b16 %v417
      %v969 = vunpack.c.h.b16 %v417
      %v970 = vunpack.c.l.b16 %v418
      %v971 = vunpack.c.h.b16 %v418
      %v972 = vunpack.c.l.b16 %v419
      %v973 = vunpack.c.h.b16 %v419
      %v974 = vunpack.c.l.b16 %v420
      %v975 = vunpack.c.h.b16 %v420
      %v976 = vunpack.c.l.b16 %v421
      %v977 = vpack.c.b16 %v680, %v671
      %v978 = vpack.c.b16 %v681, %v672
      %v979 = vpack.c.b16 %v682, %v673
      %v980 = vpack.c.b16 %v683, %v674
      %v981 = vpack.c.b16 %v684, %v675
      %v982 = vpack.c.b16 %v685, %v676
      %v983 = vpack.c.b16 %v686, %v677
      %v984 = vpack.c.b16 %v687, %v678
      %v985 = vpack.c.b16 %v688, %v679
      %v986 = vpack.c.b16 %v698, %v689
      %v987 = vpack.c.b16 %v699, %v690
      %v988 = vpack.c.b16 %v700, %v691
      %v989 = vpack.c.b16 %v701, %v692
      %v990 = vpack.c.b16 %v702, %v693
      %v991 = vpack.c.b16 %v703, %v694
      %v992 = vpack.c.b16 %v704, %v695
      %v993 = vpack.c.b16 %v705, %v696
      %v994 = vpack.c.b16 %v706, %v697
      %v995 = vpack.c.b16 %v716, %v707
      %v996 = vpack.c.b16 %v717, %v708
      %v997 = vpack.c.b16 %v718, %v709
      %v998 = vpack.c.b16 %v719, %v710
      %v999 = vpack.c.b16 %v720, %v711
      %v1000 = vpack.c.b16 %v721, %v712
      %v1001 = vpack.c.b16 %v722, %v713
      %v1002 = vpack.c.b16 %v723, %v714
      %v1003 = vpack.c.b16 %v724, %v715
      %v1004 = vpack.c.b16 %v734, %v725
      %v1005 = vpack.c.b16 %v735, %v726
      %v1006 = vpack.c.b16 %v736, %v727
      %v1007 = vpack.c.b16 %v737, %v728
      %v1008 = vpack.c.b16 %v738, %v729
      %v1009 = vpack.c.b16 %v739, %v730
      %v1010 = vpack.c.b16 %v740, %v731
      %v1011 = vpack.c.b16 %v741, %v732
      %v1012 = vpack.c.b16 %v742, %v733
      %v1013 = vpack.c.b16 %v752, %v743
      %v1014 = vpack.c.b16 %v753, %v744
      %v1015 = vpack.c.b16 %v754, %v745
      %v1016 = vpack.c.b16 %v755, %v746
      %v1017 = vpack.c.b16 %v756, %v747
      %v1018 = vpack.c.b16 %v757, %v748
      %v1019 = vpack.c.b16 %v758, %v749
      %v1020 = vpack.c.b16 %v759, %v750
      %v1021 = vpack.c.b16 %v760, %v751
      %v1022 = vpack.c.b16 %v770, %v761
      %v1023 = vpack.c.b16 %v771, %v762
      %v1024 = vpack.c.b16 %v772, %v763
      %v1025 = vpack.c.b16 %v773, %v764
      %v1026 = vpack.c.b16 %v774, %v765
      %v1027 = vpack.c.b16 %v775, %v766
      %v1028 = vpack.c.b16 %v776, %v767
      %v1029 = vpack.c.b16 %v777, %v768
      %v1030 = vpack.c.b16 %v778, %v769
      %v1031 = vpack.c.b16 %v788, %v779
      %v1032 = vpack.c.b16 %v789, %v780
      %v1033 = vpack.c.b16 %v790, %v781
      %v1034 = vpack.c.b16 %v791, %v782
      %v1035 = vpack.c.b16 %v792, %v783
      %v1036 = vpack.c.b16 %v793, %v784
      %v1037 = vpack.c.b16 %v794, %v785
      %v1038 = vpack.c.b16 %v795, %v786
      %v1039 = vpack.c.b16 %v796, %v787
      %v1040 = vpack.c.b16 %v806, %v797
      %v1041 = vpack.c.b16 %v807, %v798
      %v1042 = vpack.c.b16 %v808, %v799
      %v1043 = vpack.c.b16 %v809, %v800
      %v1044 = vpack.c.b16 %v810, %v801
      %v1045 = vpack.c.b16 %v811, %v802
      %v1046 = vpack.c.b16 %v812, %v803
      %v1047 = vpack.c.b16 %v813, %v804
      %v1048 = vpack.c.b16 %v814, %v805
      %v1049 = vpack.c.b16 %v824, %v815
      %v1050 = vpack.c.b16 %v825, %v816
      %v1051 = vpack.c.b16 %v826, %v817
      %v1052 = vpack.c.b16 %v827, %v818
      %v1053 = vpack.c.b16 %v828, %v819
      %v1054 = vpack.c.b16 %v829, %v820
      %v1055 = vpack.c.b16 %v830, %v821
      %v1056 = vpack.c.b16 %v831, %v822
      %v1057 = vpack.c.b16 %v832, %v823
      %v1058 = vpack.c.b16 %v842, %v833
      %v1059 = vpack.c.b16 %v843, %v834
      %v1060 = vpack.c.b16 %v844, %v835
      %v1061 = vpack.c.b16 %v845, %v836
      %v1062 = vpack.c.b16 %v846, %v837
      %v1063 = vpack.c.b16 %v847, %v838
      %v1064 = vpack.c.b16 %v848, %v839
      %v1065 = vpack.c.b16 %v849, %v840
      %v1066 = vpack.c.b16 %v850, %v841
      %v1067 = vpack.c.b16 %v860, %v851
      %v1068 = vpack.c.b16 %v861, %v852
      %v1069 = vpack.c.b16 %v862, %v853
      %v1070 = vpack.c.b16 %v863, %v854
      %v1071 = vpack.c.b16 %v864, %v855
      %v1072 = vpack.c.b16 %v865, %v856
      %v1073 = vpack.c.b16 %v866, %v857
      %v1074 = vpack.c.b16 %v867, %v858
      %v1075 = vpack.c.b16 %v868, %v859
      %v1076 = vpack.c.b16 %v878, %v869
      %v1077 = vpack.c.b16 %v879, %v870
      %v1078 = vpack.c.b16 %v880, %v871
      %v1079 = vpack.c.b16 %v881, %v872
      %v1080 = vpack.c.b16 %v882, %v873
      %v1081 = vpack.c.b16 %v883, %v874
      %v1082 = vpack.c.b16 %v884, %v875
      %v1083 = vpack.c.b16 %v885, %v876
      %v1084 = vpack.c.b16 %v886, %v877
      %v1085 = vpack.c.b16 %v896, %v887
      %v1086 = vpack.c.b16 %v897, %v888
      %v1087 = vpack.c.b16 %v898, %v889
      %v1088 = vpack.c.b16 %v899, %v890
      %v1089 = vpack.c.b16 %v900, %v891
      %v1090 = vpack.c.b16 %v901, %v892
      %v1091 = vpack.c.b16 %v902, %v893
      %v1092 = vpack.c.b16 %v903, %v894
      %v1093 = vpack.c.b16 %v904, %v895
      %v1094 = vpack.c.b16 %v914, %v905
      %v1095 = vpack.c.b16 %v915, %v906
      %v1096 = vpack.c.b16 %v916, %v907
      %v1097 = vpack.c.b16 %v917, %v908
      %v1098 = vpack.c.b16 %v918, %v909
      %v1099 = vpack.c.b16 %v919, %v910
      %v1100 = vpack.c.b16 %v920, %v911
      %v1101 = vpack.c.b16 %v921, %v912
      %v1102 = vpack.c.b16 %v922, %v913
      %v1103 = vpack.c.b16 %v932, %v923
      %v1104 = vpack.c.b16 %v933, %v924
      %v1105 = vpack.c.b16 %v934, %v925
      %v1106 = vpack.c.b16 %v935, %v926
      %v1107 = vpack.c.b16 %v936, %v927
      %v1108 = vpack.c.b16 %v937, %v928
      %v1109 = vpack.c.b16 %v938, %v929
      %v1110 = vpack.c.b16 %v939, %v930
      %v1111 = vpack.c.b16 %v940, %v931
      %v1112 = vpack.c.b16 %v950, %v941
      %v1113 = vpack.c.b16 %v951, %v942
      %v1114 = vpack.c.b16 %v952, %v943
      %v1115 = vpack.c.b16 %v953, %v944
      %v1116 = vpack.c.b16 %v954, %v945
      %v1117 = vpack.c.b16 %v955, %v946
      %v1118 = vpack.c.b16 %v956, %v947
      %v1119 = vpack.c.b16 %v957, %v948
      %v1120 = vpack.c.b16 %v958, %v949
      %v1121 = vpack.c.b16 %v968, %v959
      %v1122 = vpack.c.b16 %v969, %v960
      %v1123 = vpack.c.b16 %v970, %v961
      %v1124 = vpack.c.b16 %v971, %v962
      %v1125 = vpack.c.b16 %v972, %v963
      %v1126 = vpack.c.b16 %v973, %v964
      %v1127 = vpack.c.b16 %v974, %v965
      %v1128 = vpack.c.b16 %v975, %v966
      %v1129 = vpack.c.b16 %v976, %v967
      %vm1283 = vcmask 130048
      %v1285 = vsel %vm1283, %v493, 0
      %v1288 = vsel %vm1283, %v496, 0
      %1290 = vmatprep.subr.bf16.mxu0 %v978
      %1291 = vmatpush1.bf16.msra.mxu0 %v977
      %1292 = vmatprep.subr.bf16.mxu0 %v987
      %1293 = vmatpush1.bf16.msra.mxu0 %v986
      %1294 = vmatprep.subr.bf16.mxu0 %v996
      %1295 = vmatpush1.bf16.msra.mxu0 %v995
      %1296 = vmatprep.subr.bf16.mxu0 %v1005
      %1297 = vmatpush1.bf16.msra.mxu0 %v1004
      %1298 = vmatprep.subr.bf16.mxu0 %v1014
      %1299 = vmatpush1.bf16.msra.mxu0 %v1013
      %1300 = vmatprep.subr.bf16.mxu0 %v1023
      %1301 = vmatpush1.bf16.msra.mxu0 %v1022
      %1302 = vmatprep.subr.bf16.mxu0 %v1032
      %1303 = vmatpush1.bf16.msra.mxu0 %v1031
      %1304 = vmatprep.subr.bf16.mxu0 %v1041
      %1305 = vmatpush1.bf16.msra.mxu0 %v1040
      %1306 = vmatprep.subr.bf16.mxu0 %v1050
      %1307 = vmatpush1.bf16.msra.mxu0 %v1049
      %1308 = vmatprep.subr.bf16.mxu0 %v1059
      %1309 = vmatpush1.bf16.msra.mxu0 %v1058
      %1310 = vmatprep.subr.bf16.mxu0 %v1068
      %1311 = vmatpush1.bf16.msra.mxu0 %v1067
      %1312 = vmatprep.subr.bf16.mxu0 %v1077
      %1313 = vmatpush1.bf16.msra.mxu0 %v1076
      %1314 = vmatprep.subr.bf16.mxu0 %v1086
      %1315 = vmatpush1.bf16.msra.mxu0 %v1085
      %1316 = vmatprep.subr.bf16.mxu0 %v1095
      %1317 = vmatpush1.bf16.msra.mxu0 %v1094
      %1318 = vmatprep.subr.bf16.mxu0 %v1104
      %1319 = vmatpush1.bf16.msra.mxu0 %v1103
      %1320 = vmatprep.subr.bf16.mxu0 %v1113
      %1321 = vmatpush1.bf16.msra.mxu0 %v1112
      %1322 = vmatprep.mubr.bf16.mxu0 %v492
      %1323 = vmatmul.mubr.bf16.gmra.mrb[0].mxu0 %v491
      %v1324 = vpop.f32.mrb[0].mxu0
      %v1325 = vadd.f32 %v429, %v1324
      %v1326 = vpop.f32.mrb[0].mxu0
      %v1327 = vadd.f32 %v433, %v1326
      %v1328 = vpop.f32.mrb[0].mxu0
      %v1329 = vadd.f32 %v429, %v1328
      %v1330 = vpop.f32.mrb[0].mxu0
      %v1331 = vadd.f32 %v433, %v1330
      %1332 = vmatprep.mubr.bf16.mxu0 %v495
      %1333 = vmatmul.mubr.bf16.gmra.mrb[0].mxu0 %v494
      %v1334 = vpop.f32.mrb[0].mxu0
      %v1335 = vadd.f32 %v429, %v1334
      %v1336 = vpop.f32.mrb[0].mxu0
      %v1337 = vadd.f32 %v433, %v1336
      %v1338 = vpop.f32.mrb[0].mxu0
      %v1339 = vadd.f32 %v429, %v1338
      %v1340 = vpop.f32.mrb[0].mxu0
      %v1341 = vadd.f32 %v433, %v1340
      %1342 = vdwg.mxu0
      %1343 = vmatprep.subr.bf16.mxu0 %v1122
      %1344 = vmatpush1.bf16.msra.mxu0 %v1121
      %1345 = vmatprep.subr.bf16.mxu0 0
      %1346 = vmatpush1.bf16.msra.mxu0 0
      %1347 = vmatprep.subr.bf16.mxu0 0
      %1348 = vmatpush1.bf16.msra.mxu0 0
      %1349 = vmatprep.subr.bf16.mxu0 0
      %1350 = vmatpush1.bf16.msra.mxu0 0
      %1351 = vmatprep.subr.bf16.mxu0 0
      %1352 = vmatpush1.bf16.msra.mxu0 0
      %1353 = vmatprep.subr.bf16.mxu0 0
      %1354 = vmatpush1.bf16.msra.mxu0 0
      %1355 = vmatprep.subr.bf16.mxu0 0
      %1356 = vmatpush1.bf16.msra.mxu0 0
      %1357 = vmatprep.subr.bf16.mxu0 0
      %1358 = vmatpush1.bf16.msra.mxu0 0
      %1359 = vmatprep.subr.bf16.mxu0 0
      %1360 = vmatpush1.bf16.msra.mxu0 0
      %1361 = vmatprep.subr.bf16.mxu0 0
      %1362 = vmatpush1.bf16.msra.mxu0 0
      %1363 = vmatprep.subr.bf16.mxu0 0
      %1364 = vmatpush1.bf16.msra.mxu0 0
      %1365 = vmatprep.subr.bf16.mxu0 0
      %1366 = vmatpush1.bf16.msra.mxu0 0
      %1367 = vmatprep.subr.bf16.mxu0 0
      %1368 = vmatpush1.bf16.msra.mxu0 0
      %1369 = vmatprep.subr.bf16.mxu0 0
      %1370 = vmatpush1.bf16.msra.mxu0 0
      %1371 = vmatprep.subr.bf16.mxu0 0
      %1372 = vmatpush1.bf16.msra.mxu0 0
      %1373 = vmatprep.subr.bf16.mxu0 0
      %1374 = vmatpush1.bf16.msra.mxu0 0
      %1375 = vmatprep.mubr.bf16.mxu0 0
      %1376 = vmatmul.mubr.bf16.gmra.mrb[0].mxu0 %v1285
      %v1377 = vpop.f32.mrb[0].mxu0
      %v1378 = vadd.f32 %v1325, %v1377
      %v1379 = vpop.f32.mrb[0].mxu0
      %v1380 = vadd.f32 %v1327, %v1379
      %v1381 = vpop.f32.mrb[0].mxu0
      %v1382 = vadd.f32 %v1329, %v1381
      %v1383 = vpop.f32.mrb[0].mxu0
      %v1384 = vadd.f32 %v1331, %v1383
      %1385 = vmatprep.mubr.bf16.mxu0 0
      %1386 = vmatmul.mubr.bf16.gmra.mrb[0].mxu0 %v1288
      %v1387 = vpop.f32.mrb[0].mxu0
      %v1388 = vadd.f32 %v1335, %v1387
      %v1389 = vpop.f32.mrb[0].mxu0
      %v1390 = vadd.f32 %v1337, %v1389
      %v1391 = vpop.f32.mrb[0].mxu0
      %v1392 = vadd.f32 %v1339, %v1391
      %v1393 = vpop.f32.mrb[0].mxu0
      %v1394 = vadd.f32 %v1341, %v1393
      %1395 = vdwg.mxu0
      %1396 = vmatprep.subr.bf16.mxu0 %v980
      %1397 = vmatpush1.bf16.msra.mxu0 %v979
      %1398 = vmatprep.subr.bf16.mxu0 %v989
      %1399 = vmatpush1.bf16.msra.mxu0 %v988
      %1400 = vmatprep.subr.bf16.mxu0 %v998
      %1401 = vmatpush1.bf16.msra.mxu0 %v997
      %1402 = vmatprep.subr.bf16.mxu0 %v1007
      %1403 = vmatpush1.bf16.msra.mxu0 %v1006
      %1404 = vmatprep.subr.bf16.mxu0 %v1016
      %1405 = vmatpush1.bf16.msra.mxu0 %v1015
      %1406 = vmatprep.subr.bf16.mxu0 %v1025
      %1407 = vmatpush1.bf16.msra.mxu0 %v1024
      %1408 = vmatprep.subr.bf16.mxu0 %v1034
      %1409 = vmatpush1.bf16.msra.mxu0 %v1033
      %1410 = vmatprep.subr.bf16.mxu0 %v1043
      %1411 = vmatpush1.bf16.msra.mxu0 %v1042
      %1412 = vmatprep.subr.bf16.mxu0 %v1052
      %1413 = vmatpush1.bf16.msra.mxu0 %v1051
      %1414 = vmatprep.subr.bf16.mxu0 %v1061
      %1415 = vmatpush1.bf16.msra.mxu0 %v1060
      %1416 = vmatprep.subr.bf16.mxu0 %v1070
      %1417 = vmatpush1.bf16.msra.mxu0 %v1069
      %1418 = vmatprep.subr.bf16.mxu0 %v1079
      %1419 = vmatpush1.bf16.msra.mxu0 %v1078
      %1420 = vmatprep.subr.bf16.mxu0 %v1088
      %1421 = vmatpush1.bf16.msra.mxu0 %v1087
      %1422 = vmatprep.subr.bf16.mxu0 %v1097
      %1423 = vmatpush1.bf16.msra.mxu0 %v1096
      %1424 = vmatprep.subr.bf16.mxu0 %v1106
      %1425 = vmatpush1.bf16.msra.mxu0 %v1105
      %1426 = vmatprep.subr.bf16.mxu0 %v1115
      %1427 = vmatpush1.bf16.msra.mxu0 %v1114
      %1428 = vmatprep.mubr.bf16.mxu0 %v492
      %1429 = vmatmul.mubr.bf16.gmra.mrb[0].mxu0 %v491
      %v1430 = vpop.f32.mrb[0].mxu0
      %v1431 = vadd.f32 %v437, %v1430
      %v1432 = vpop.f32.mrb[0].mxu0
      %v1433 = vadd.f32 %v441, %v1432
      %v1434 = vpop.f32.mrb[0].mxu0
      %v1435 = vadd.f32 %v437, %v1434
      %v1436 = vpop.f32.mrb[0].mxu0
      %v1437 = vadd.f32 %v441, %v1436
      %1438 = vmatprep.mubr.bf16.mxu0 %v495
      %1439 = vmatmul.mubr.bf16.gmra.mrb[0].mxu0 %v494
      %v1440 = vpop.f32.mrb[0].mxu0
      %v1441 = vadd.f32 %v437, %v1440
      %v1442 = vpop.f32.mrb[0].mxu0
      %v1443 = vadd.f32 %v441, %v1442
      %v1444 = vpop.f32.mrb[0].mxu0
      %v1445 = vadd.f32 %v437, %v1444
      %v1446 = vpop.f32.mrb[0].mxu0
      %v1447 = vadd.f32 %v441, %v1446
      %1448 = vdwg.mxu0
      %1449 = vmatprep.subr.bf16.mxu0 %v1124
      %1450 = vmatpush1.bf16.msra.mxu0 %v1123
      %1451 = vmatprep.subr.bf16.mxu0 0
      %1452 = vmatpush1.bf16.msra.mxu0 0
      %1453 = vmatprep.subr.bf16.mxu0 0
      %1454 = vmatpush1.bf16.msra.mxu0 0
      %1455 = vmatprep.subr.bf16.mxu0 0
      %1456 = vmatpush1.bf16.msra.mxu0 0
      %1457 = vmatprep.subr.bf16.mxu0 0
      %1458 = vmatpush1.bf16.msra.mxu0 0
      %1459 = vmatprep.subr.bf16.mxu0 0
      %1460 = vmatpush1.bf16.msra.mxu0 0
      %1461 = vmatprep.subr.bf16.mxu0 0
      %1462 = vmatpush1.bf16.msra.mxu0 0
      %1463 = vmatprep.subr.bf16.mxu0 0
      %1464 = vmatpush1.bf16.msra.mxu0 0
      %1465 = vmatprep.subr.bf16.mxu0 0
      %1466 = vmatpush1.bf16.msra.mxu0 0
      %1467 = vmatprep.subr.bf16.mxu0 0
      %1468 = vmatpush1.bf16.msra.mxu0 0
      %1469 = vmatprep.subr.bf16.mxu0 0
      %1470 = vmatpush1.bf16.msra.mxu0 0
      %1471 = vmatprep.subr.bf16.mxu0 0
      %1472 = vmatpush1.bf16.msra.mxu0 0
      %1473 = vmatprep.subr.bf16.mxu0 0
      %1474 = vmatpush1.bf16.msra.mxu0 0
      %1475 = vmatprep.subr.bf16.mxu0 0
      %1476 = vmatpush1.bf16.msra.mxu0 0
      %1477 = vmatprep.subr.bf16.mxu0 0
      %1478 = vmatpush1.bf16.msra.mxu0 0
      %1479 = vmatprep.subr.bf16.mxu0 0
      %1480 = vmatpush1.bf16.msra.mxu0 0
      %1481 = vmatprep.mubr.bf16.mxu0 0
      %1482 = vmatmul.mubr.bf16.gmra.mrb[0].mxu0 %v1285
      %v1483 = vpop.f32.mrb[0].mxu0
      %v1484 = vadd.f32 %v1431, %v1483
      %v1485 = vpop.f32.mrb[0].mxu0
      %v1486 = vadd.f32 %v1433, %v1485
      %v1487 = vpop.f32.mrb[0].mxu0
      %v1488 = vadd.f32 %v1435, %v1487
      %v1489 = vpop.f32.mrb[0].mxu0
      %v1490 = vadd.f32 %v1437, %v1489
      %1491 = vmatprep.mubr.bf16.mxu0 0
      %1492 = vmatmul.mubr.bf16.gmra.mrb[0].mxu0 %v1288
      %v1493 = vpop.f32.mrb[0].mxu0
      %v1494 = vadd.f32 %v1441, %v1493
      %v1495 = vpop.f32.mrb[0].mxu0
      %v1496 = vadd.f32 %v1443, %v1495
      %v1497 = vpop.f32.mrb[0].mxu0
      %v1498 = vadd.f32 %v1445, %v1497
      %v1499 = vpop.f32.mrb[0].mxu0
      %v1500 = vadd.f32 %v1447, %v1499
      %1501 = vdwg.mxu0
      %1502 = vmatprep.subr.bf16.mxu0 %v982
      %1503 = vmatpush1.bf16.msra.mxu0 %v981
      %1504 = vmatprep.subr.bf16.mxu0 %v991
      %1505 = vmatpush1.bf16.msra.mxu0 %v990
      %1506 = vmatprep.subr.bf16.mxu0 %v1000
      %1507 = vmatpush1.bf16.msra.mxu0 %v999
      %1508 = vmatprep.subr.bf16.mxu0 %v1009
      %1509 = vmatpush1.bf16.msra.mxu0 %v1008
      %1510 = vmatprep.subr.bf16.mxu0 %v1018
      %1511 = vmatpush1.bf16.msra.mxu0 %v1017
      %1512 = vmatprep.subr.bf16.mxu0 %v1027
      %1513 = vmatpush1.bf16.msra.mxu0 %v1026
      %1514 = vmatprep.subr.bf16.mxu0 %v1036
      %1515 = vmatpush1.bf16.msra.mxu0 %v1035
      %1516 = vmatprep.subr.bf16.mxu0 %v1045
      %1517 = vmatpush1.bf16.msra.mxu0 %v1044
      %1518 = vmatprep.subr.bf16.mxu0 %v1054
      %1519 = vmatpush1.bf16.msra.mxu0 %v1053
      %1520 = vmatprep.subr.bf16.mxu0 %v1063
      %1521 = vmatpush1.bf16.msra.mxu0 %v1062
      %1522 = vmatprep.subr.bf16.mxu0 %v1072
      %1523 = vmatpush1.bf16.msra.mxu0 %v1071
      %1524 = vmatprep.subr.bf16.mxu0 %v1081
      %1525 = vmatpush1.bf16.msra.mxu0 %v1080
      %1526 = vmatprep.subr.bf16.mxu0 %v1090
      %1527 = vmatpush1.bf16.msra.mxu0 %v1089
      %1528 = vmatprep.subr.bf16.mxu0 %v1099
      %1529 = vmatpush1.bf16.msra.mxu0 %v1098
      %1530 = vmatprep.subr.bf16.mxu0 %v1108
      %1531 = vmatpush1.bf16.msra.mxu0 %v1107
      %1532 = vmatprep.subr.bf16.mxu0 %v1117
      %1533 = vmatpush1.bf16.msra.mxu0 %v1116
      %1534 = vmatprep.mubr.bf16.mxu0 %v492
      %1535 = vmatmul.mubr.bf16.gmra.mrb[0].mxu0 %v491
      %v1536 = vpop.f32.mrb[0].mxu0
      %v1537 = vadd.f32 %v445, %v1536
      %v1538 = vpop.f32.mrb[0].mxu0
      %v1539 = vadd.f32 %v449, %v1538
      %v1540 = vpop.f32.mrb[0].mxu0
      %v1541 = vadd.f32 %v445, %v1540
      %v1542 = vpop.f32.mrb[0].mxu0
      %v1543 = vadd.f32 %v449, %v1542
      %1544 = vmatprep.mubr.bf16.mxu0 %v495
      %1545 = vmatmul.mubr.bf16.gmra.mrb[0].mxu0 %v494
      %v1546 = vpop.f32.mrb[0].mxu0
      %v1547 = vadd.f32 %v445, %v1546
      %v1548 = vpop.f32.mrb[0].mxu0
      %v1549 = vadd.f32 %v449, %v1548
      %v1550 = vpop.f32.mrb[0].mxu0
      %v1551 = vadd.f32 %v445, %v1550
      %v1552 = vpop.f32.mrb[0].mxu0
      %v1553 = vadd.f32 %v449, %v1552
      %1554 = vdwg.mxu0
      %1555 = vmatprep.subr.bf16.mxu0 %v1126
      %1556 = vmatpush1.bf16.msra.mxu0 %v1125
      %1557 = vmatprep.subr.bf16.mxu0 0
      %1558 = vmatpush1.bf16.msra.mxu0 0
      %1559 = vmatprep.subr.bf16.mxu0 0
      %1560 = vmatpush1.bf16.msra.mxu0 0
      %1561 = vmatprep.subr.bf16.mxu0 0
      %1562 = vmatpush1.bf16.msra.mxu0 0
      %1563 = vmatprep.subr.bf16.mxu0 0
      %1564 = vmatpush1.bf16.msra.mxu0 0
      %1565 = vmatprep.subr.bf16.mxu0 0
      %1566 = vmatpush1.bf16.msra.mxu0 0
      %1567 = vmatprep.subr.bf16.mxu0 0
      %1568 = vmatpush1.bf16.msra.mxu0 0
      %1569 = vmatprep.subr.bf16.mxu0 0
      %1570 = vmatpush1.bf16.msra.mxu0 0
      %1571 = vmatprep.subr.bf16.mxu0 0
      %1572 = vmatpush1.bf16.msra.mxu0 0
      %1573 = vmatprep.subr.bf16.mxu0 0
      %1574 = vmatpush1.bf16.msra.mxu0 0
      %1575 = vmatprep.subr.bf16.mxu0 0
      %1576 = vmatpush1.bf16.msra.mxu0 0
      %1577 = vmatprep.subr.bf16.mxu0 0
      %1578 = vmatpush1.bf16.msra.mxu0 0
      %1579 = vmatprep.subr.bf16.mxu0 0
      %1580 = vmatpush1.bf16.msra.mxu0 0
      %1581 = vmatprep.subr.bf16.mxu0 0
      %1582 = vmatpush1.bf16.msra.mxu0 0
      %1583 = vmatprep.subr.bf16.mxu0 0
      %1584 = vmatpush1.bf16.msra.mxu0 0
      %1585 = vmatprep.subr.bf16.mxu0 0
      %1586 = vmatpush1.bf16.msra.mxu0 0
      %1587 = vmatprep.mubr.bf16.mxu0 0
      %1588 = vmatmul.mubr.bf16.gmra.mrb[0].mxu0 %v1285
      %v1589 = vpop.f32.mrb[0].mxu0
      %v1590 = vadd.f32 %v1537, %v1589
      %v1591 = vpop.f32.mrb[0].mxu0
      %v1592 = vadd.f32 %v1539, %v1591
      %v1593 = vpop.f32.mrb[0].mxu0
      %v1594 = vadd.f32 %v1541, %v1593
      %v1595 = vpop.f32.mrb[0].mxu0
      %v1596 = vadd.f32 %v1543, %v1595
      %1597 = vmatprep.mubr.bf16.mxu0 0
      %1598 = vmatmul.mubr.bf16.gmra.mrb[0].mxu0 %v1288
      %v1599 = vpop.f32.mrb[0].mxu0
      %v1600 = vadd.f32 %v1547, %v1599
      %v1601 = vpop.f32.mrb[0].mxu0
      %v1602 = vadd.f32 %v1549, %v1601
      %v1603 = vpop.f32.mrb[0].mxu0
      %v1604 = vadd.f32 %v1551, %v1603
      %v1605 = vpop.f32.mrb[0].mxu0
      %v1606 = vadd.f32 %v1553, %v1605
      %1607 = vdwg.mxu0
      %1608 = vmatprep.subr.bf16.mxu0 %v984
      %1609 = vmatpush1.bf16.msra.mxu0 %v983
      %1610 = vmatprep.subr.bf16.mxu0 %v993
      %1611 = vmatpush1.bf16.msra.mxu0 %v992
      %1612 = vmatprep.subr.bf16.mxu0 %v1002
      %1613 = vmatpush1.bf16.msra.mxu0 %v1001
      %1614 = vmatprep.subr.bf16.mxu0 %v1011
      %1615 = vmatpush1.bf16.msra.mxu0 %v1010
      %1616 = vmatprep.subr.bf16.mxu0 %v1020
      %1617 = vmatpush1.bf16.msra.mxu0 %v1019
      %1618 = vmatprep.subr.bf16.mxu0 %v1029
      %1619 = vmatpush1.bf16.msra.mxu0 %v1028
      %1620 = vmatprep.subr.bf16.mxu0 %v1038
      %1621 = vmatpush1.bf16.msra.mxu0 %v1037
      %1622 = vmatprep.subr.bf16.mxu0 %v1047
      %1623 = vmatpush1.bf16.msra.mxu0 %v1046
      %1624 = vmatprep.subr.bf16.mxu0 %v1056
      %1625 = vmatpush1.bf16.msra.mxu0 %v1055
      %1626 = vmatprep.subr.bf16.mxu0 %v1065
      %1627 = vmatpush1.bf16.msra.mxu0 %v1064
      %1628 = vmatprep.subr.bf16.mxu0 %v1074
      %1629 = vmatpush1.bf16.msra.mxu0 %v1073
      %1630 = vmatprep.subr.bf16.mxu0 %v1083
      %1631 = vmatpush1.bf16.msra.mxu0 %v1082
      %1632 = vmatprep.subr.bf16.mxu0 %v1092
      %1633 = vmatpush1.bf16.msra.mxu0 %v1091
      %1634 = vmatprep.subr.bf16.mxu0 %v1101
      %1635 = vmatpush1.bf16.msra.mxu0 %v1100
      %1636 = vmatprep.subr.bf16.mxu0 %v1110
      %1637 = vmatpush1.bf16.msra.mxu0 %v1109
      %1638 = vmatprep.subr.bf16.mxu0 %v1119
      %1639 = vmatpush1.bf16.msra.mxu0 %v1118
      %1640 = vmatprep.mubr.bf16.mxu0 %v492
      %1641 = vmatmul.mubr.bf16.gmra.mrb[0].mxu0 %v491
      %v1642 = vpop.f32.mrb[0].mxu0
      %v1643 = vadd.f32 %v453, %v1642
      %v1644 = vpop.f32.mrb[0].mxu0
      %v1645 = vadd.f32 %v457, %v1644
      %v1646 = vpop.f32.mrb[0].mxu0
      %v1647 = vadd.f32 %v453, %v1646
      %v1648 = vpop.f32.mrb[0].mxu0
      %v1649 = vadd.f32 %v457, %v1648
      %1650 = vmatprep.mubr.bf16.mxu0 %v495
      %1651 = vmatmul.mubr.bf16.gmra.mrb[0].mxu0 %v494
      %v1652 = vpop.f32.mrb[0].mxu0
      %v1653 = vadd.f32 %v453, %v1652
      %v1654 = vpop.f32.mrb[0].mxu0
      %v1655 = vadd.f32 %v457, %v1654
      %v1656 = vpop.f32.mrb[0].mxu0
      %v1657 = vadd.f32 %v453, %v1656
      %v1658 = vpop.f32.mrb[0].mxu0
      %v1659 = vadd.f32 %v457, %v1658
      %1660 = vdwg.mxu0
      %1661 = vmatprep.subr.bf16.mxu0 %v1128
      %1662 = vmatpush1.bf16.msra.mxu0 %v1127
      %1663 = vmatprep.subr.bf16.mxu0 0
      %1664 = vmatpush1.bf16.msra.mxu0 0
      %1665 = vmatprep.subr.bf16.mxu0 0
      %1666 = vmatpush1.bf16.msra.mxu0 0
      %1667 = vmatprep.subr.bf16.mxu0 0
      %1668 = vmatpush1.bf16.msra.mxu0 0
      %1669 = vmatprep.subr.bf16.mxu0 0
      %1670 = vmatpush1.bf16.msra.mxu0 0
      %1671 = vmatprep.subr.bf16.mxu0 0
      %1672 = vmatpush1.bf16.msra.mxu0 0
      %1673 = vmatprep.subr.bf16.mxu0 0
      %1674 = vmatpush1.bf16.msra.mxu0 0
      %1675 = vmatprep.subr.bf16.mxu0 0
      %1676 = vmatpush1.bf16.msra.mxu0 0
      %1677 = vmatprep.subr.bf16.mxu0 0
      %1678 = vmatpush1.bf16.msra.mxu0 0
      %1679 = vmatprep.subr.bf16.mxu0 0
      %1680 = vmatpush1.bf16.msra.mxu0 0
      %1681 = vmatprep.subr.bf16.mxu0 0
      %1682 = vmatpush1.bf16.msra.mxu0 0
      %1683 = vmatprep.subr.bf16.mxu0 0
      %1684 = vmatpush1.bf16.msra.mxu0 0
      %1685 = vmatprep.subr.bf16.mxu0 0
      %1686 = vmatpush1.bf16.msra.mxu0 0
      %1687 = vmatprep.subr.bf16.mxu0 0
      %1688 = vmatpush1.bf16.msra.mxu0 0
      %1689 = vmatprep.subr.bf16.mxu0 0
      %1690 = vmatpush1.bf16.msra.mxu0 0
      %1691 = vmatprep.subr.bf16.mxu0 0
      %1692 = vmatpush1.bf16.msra.mxu0 0
      %1693 = vmatprep.mubr.bf16.mxu0 0
      %1694 = vmatmul.mubr.bf16.gmra.mrb[0].mxu0 %v1285
      %v1695 = vpop.f32.mrb[0].mxu0
      %v1696 = vadd.f32 %v1643, %v1695
      %v1697 = vpop.f32.mrb[0].mxu0
      %v1698 = vadd.f32 %v1645, %v1697
      %v1699 = vpop.f32.mrb[0].mxu0
      %v1700 = vadd.f32 %v1647, %v1699
      %v1701 = vpop.f32.mrb[0].mxu0
      %v1702 = vadd.f32 %v1649, %v1701
      %1703 = vmatprep.mubr.bf16.mxu0 0
      %1704 = vmatmul.mubr.bf16.gmra.mrb[0].mxu0 %v1288
      %v1705 = vpop.f32.mrb[0].mxu0
      %v1706 = vadd.f32 %v1653, %v1705
      %v1707 = vpop.f32.mrb[0].mxu0
      %v1708 = vadd.f32 %v1655, %v1707
      %v1709 = vpop.f32.mrb[0].mxu0
      %v1710 = vadd.f32 %v1657, %v1709
      %v1711 = vpop.f32.mrb[0].mxu0
      %v1712 = vadd.f32 %v1659, %v1711
      %1713 = vdwg.mxu0
      %1714 = vmatprep.subr.bf16.mxu0 0
      %1715 = vmatpush1.bf16.msra.mxu0 %v985
      %1716 = vmatprep.subr.bf16.mxu0 0
      %1717 = vmatpush1.bf16.msra.mxu0 %v994
      %1718 = vmatprep.subr.bf16.mxu0 0
      %1719 = vmatpush1.bf16.msra.mxu0 %v1003
      %1720 = vmatprep.subr.bf16.mxu0 0
      %1721 = vmatpush1.bf16.msra.mxu0 %v1012
      %1722 = vmatprep.subr.bf16.mxu0 0
      %1723 = vmatpush1.bf16.msra.mxu0 %v1021
      %1724 = vmatprep.subr.bf16.mxu0 0
      %1725 = vmatpush1.bf16.msra.mxu0 %v1030
      %1726 = vmatprep.subr.bf16.mxu0 0
      %1727 = vmatpush1.bf16.msra.mxu0 %v1039
      %1728 = vmatprep.subr.bf16.mxu0 0
      %1729 = vmatpush1.bf16.msra.mxu0 %v1048
      %1730 = vmatprep.subr.bf16.mxu0 0
      %1731 = vmatpush1.bf16.msra.mxu0 %v1057
      %1732 = vmatprep.subr.bf16.mxu0 0
      %1733 = vmatpush1.bf16.msra.mxu0 %v1066
      %1734 = vmatprep.subr.bf16.mxu0 0
      %1735 = vmatpush1.bf16.msra.mxu0 %v1075
      %1736 = vmatprep.subr.bf16.mxu0 0
      %1737 = vmatpush1.bf16.msra.mxu0 %v1084
      %1738 = vmatprep.subr.bf16.mxu0 0
      %1739 = vmatpush1.bf16.msra.mxu0 %v1093
      %1740 = vmatprep.subr.bf16.mxu0 0
      %1741 = vmatpush1.bf16.msra.mxu0 %v1102
      %1742 = vmatprep.subr.bf16.mxu0 0
      %1743 = vmatpush1.bf16.msra.mxu0 %v1111
      %1744 = vmatprep.subr.bf16.mxu0 0
      %1745 = vmatpush1.bf16.msra.mxu0 %v1120
      %1746 = vmatprep.mubr.bf16.mxu0 %v492
      %1747 = vmatmul.mubr.bf16.gmra.mrb[0].mxu0 %v491
      %v1748 = vpop.f32.mrb[0].mxu0
      %v1749 = vadd.f32 %v461, %v1748
      %v1750 = vpop.f32.mrb[0].mxu0
      %v1751 = vpop.f32.mrb[0].mxu0
      %v1752 = vadd.f32 %v461, %v1751
      %v1753 = vpop.f32.mrb[0].mxu0
      %1754 = vmatprep.mubr.bf16.mxu0 %v495
      %1755 = vmatmul.mubr.bf16.gmra.mrb[0].mxu0 %v494
      %v1756 = vpop.f32.mrb[0].mxu0
      %v1757 = vadd.f32 %v461, %v1756
      %v1758 = vpop.f32.mrb[0].mxu0
      %v1759 = vpop.f32.mrb[0].mxu0
      %v1760 = vadd.f32 %v461, %v1759
      %v1761 = vpop.f32.mrb[0].mxu0
      %1762 = vdwg.mxu0
      %1763 = vmatprep.subr.bf16.mxu0 0
      %1764 = vmatpush1.bf16.msra.mxu0 %v1129
      %1765 = vmatprep.subr.bf16.mxu0 0
      %1766 = vmatpush1.bf16.msra.mxu0 0
      %1767 = vmatprep.subr.bf16.mxu0 0
      %1768 = vmatpush1.bf16.msra.mxu0 0
      %1769 = vmatprep.subr.bf16.mxu0 0
      %1770 = vmatpush1.bf16.msra.mxu0 0
      %1771 = vmatprep.subr.bf16.mxu0 0
      %1772 = vmatpush1.bf16.msra.mxu0 0
      %1773 = vmatprep.subr.bf16.mxu0 0
      %1774 = vmatpush1.bf16.msra.mxu0 0
      %1775 = vmatprep.subr.bf16.mxu0 0
      %1776 = vmatpush1.bf16.msra.mxu0 0
      %1777 = vmatprep.subr.bf16.mxu0 0
      %1778 = vmatpush1.bf16.msra.mxu0 0
      %1779 = vmatprep.subr.bf16.mxu0 0
      %1780 = vmatpush1.bf16.msra.mxu0 0
      %1781 = vmatprep.subr.bf16.mxu0 0
      %1782 = vmatpush1.bf16.msra.mxu0 0
      %1783 = vmatprep.subr.bf16.mxu0 0
      %1784 = vmatpush1.bf16.msra.mxu0 0
      %1785 = vmatprep.subr.bf16.mxu0 0
      %1786 = vmatpush1.bf16.msra.mxu0 0
      %1787 = vmatprep.subr.bf16.mxu0 0
      %1788 = vmatpush1.bf16.msra.mxu0 0
      %1789 = vmatprep.subr.bf16.mxu0 0
      %1790 = vmatpush1.bf16.msra.mxu0 0
      %1791 = vmatprep.subr.bf16.mxu0 0
      %1792 = vmatpush1.bf16.msra.mxu0 0
      %1793 = vmatprep.subr.bf16.mxu0 0
      %1794 = vmatpush1.bf16.msra.mxu0 0
      %1795 = vmatprep.mubr.bf16.mxu0 0
      %1796 = vmatmul.mubr.bf16.gmra.mrb[0].mxu0 %v1285
      %v1797 = vpop.f32.mrb[0].mxu0
      %v1798 = vadd.f32 %v1749, %v1797
      %v1799 = vpop.f32.mrb[0].mxu0
      %v1800 = vpop.f32.mrb[0].mxu0
      %v1801 = vadd.f32 %v1752, %v1800
      %v1802 = vpop.f32.mrb[0].mxu0
      %1803 = vmatprep.mubr.bf16.mxu0 0
      %1804 = vmatmul.mubr.bf16.gmra.mrb[0].mxu0 %v1288
      %v1805 = vpop.f32.mrb[0].mxu0
      %v1806 = vadd.f32 %v1757, %v1805
      %v1807 = vpop.f32.mrb[0].mxu0
      %v1808 = vpop.f32.mrb[0].mxu0
      %v1809 = vadd.f32 %v1760, %v1808
      %v1810 = vpop.f32.mrb[0].mxu0
      %1811 = vdwg.mxu0
      %v1812 = vpack.c.bf16 %v1382, %v1378
      %v1813 = vpack.c.bf16 %v1384, %v1380
      %v1814 = vpack.c.bf16 %v1488, %v1484
      %v1815 = vpack.c.bf16 %v1490, %v1486
      %v1816 = vpack.c.bf16 %v1594, %v1590
      %v1817 = vpack.c.bf16 %v1596, %v1592
      %v1818 = vpack.c.bf16 %v1700, %v1696
      %v1819 = vpack.c.bf16 %v1702, %v1698
      %v1820 = vpack.c.bf16 %v1801, %v1798
      %v1821 = vpack.c.bf16 %v1392, %v1388
      %v1822 = vpack.c.bf16 %v1394, %v1390
      %v1823 = vpack.c.bf16 %v1498, %v1494
      %v1824 = vpack.c.bf16 %v1500, %v1496
      %v1825 = vpack.c.bf16 %v1604, %v1600
      %v1826 = vpack.c.bf16 %v1606, %v1602
      %v1827 = vpack.c.bf16 %v1710, %v1706
      %v1828 = vpack.c.bf16 %v1712, %v1708
      %v1829 = vpack.c.bf16 %v1809, %v1806
      %v1848 = vunpack.c.l.b16 %v1812
      %v1849 = vunpack.c.l.b16 %v1813
      %v1850 = vunpack.c.l.b16 %v1814
      %v1851 = vunpack.c.l.b16 %v1815
      %v1852 = vunpack.c.l.b16 %v1816
      %v1853 = vunpack.c.l.b16 %v1817
      %v1854 = vunpack.c.l.b16 %v1818
      %v1855 = vunpack.c.l.b16 %v1819
      %v1856 = vunpack.c.l.b16 %v1820
      %v1857 = vunpack.c.h.b16 %v1812
      %v1858 = vunpack.c.h.b16 %v1813
      %v1859 = vunpack.c.h.b16 %v1814
      %v1860 = vunpack.c.h.b16 %v1815
      %v1861 = vunpack.c.h.b16 %v1816
      %v1862 = vunpack.c.h.b16 %v1817
      %v1863 = vunpack.c.h.b16 %v1818
      %v1864 = vunpack.c.h.b16 %v1819
      %v1865 = vunpack.c.h.b16 %v1820
      %v1866 = vunpack.c.l.b16 %v1821
      %v1867 = vunpack.c.l.b16 %v1822
      %v1868 = vunpack.c.l.b16 %v1823
      %v1869 = vunpack.c.l.b16 %v1824
      %v1870 = vunpack.c.l.b16 %v1825
      %v1871 = vunpack.c.l.b16 %v1826
      %v1872 = vunpack.c.l.b16 %v1827
      %v1873 = vunpack.c.l.b16 %v1828
      %v1874 = vunpack.c.l.b16 %v1829
      %v1875 = vunpack.c.h.b16 %v1821
      %v1876 = vunpack.c.h.b16 %v1822
      %v1877 = vunpack.c.h.b16 %v1823
      %v1878 = vunpack.c.h.b16 %v1824
      %v1879 = vunpack.c.h.b16 %v1825
      %v1880 = vunpack.c.h.b16 %v1826
      %v1881 = vunpack.c.h.b16 %v1827
      %v1882 = vunpack.c.h.b16 %v1828
      %v1883 = vunpack.c.h.b16 %v1829
      %v1884 = vpack.c.b16 %v1849, %v1848
      %v1885 = vpack.c.b16 %v1851, %v1850
      %v1886 = vpack.c.b16 %v1853, %v1852
      %v1887 = vpack.c.b16 %v1855, %v1854
      %v1888 = vpack.c.b16 %v1856, %v1856
      %v1889 = vpack.c.b16 %v1858, %v1857
      %v1890 = vpack.c.b16 %v1860, %v1859
      %v1891 = vpack.c.b16 %v1862, %v1861
      %v1892 = vpack.c.b16 %v1864, %v1863
      %v1893 = vpack.c.b16 %v1865, %v1865
      %v1894 = vpack.c.b16 %v1867, %v1866
      %v1895 = vpack.c.b16 %v1869, %v1868
      %v1896 = vpack.c.b16 %v1871, %v1870
      %v1897 = vpack.c.b16 %v1873, %v1872
      %v1898 = vpack.c.b16 %v1874, %v1874
      %v1899 = vpack.c.b16 %v1876, %v1875
      %v1900 = vpack.c.b16 %v1878, %v1877
      %v1901 = vpack.c.b16 %v1880, %v1879
      %v1902 = vpack.c.b16 %v1882, %v1881
      %v1903 = vpack.c.b16 %v1883, %v1883
      %1924 = vst [vmem:[%s240] sm:$0xff] %v1884
      %1925 = vst [vmem:[%s240 + $0x8] sm:$0xff] %v1885
      %1926 = vst [vmem:[%s240 + $0x10] sm:$0xff] %v1886
      %1927 = vst [vmem:[%s240 + $0x18] sm:$0xff] %v1887
      %1928 = vst [vmem:[%s240 + $0x20] sm:$0xf] %v1888
      %1929 = vst [vmem:[%s240 + $0x24] sm:$0xff] %v1889
      %1930 = vst [vmem:[%s240 + $0x2c] sm:$0xff] %v1890
      %1931 = vst [vmem:[%s240 + $0x34] sm:$0xff] %v1891
      %1932 = vst [vmem:[%s240 + $0x3c] sm:$0xff] %v1892
      %1933 = vst [vmem:[%s240 + $0x44] sm:$0xf] %v1893
      %1934 = vst [vmem:[%s240 + $0x48] sm:$0xff] %v1894
      %1935 = vst [vmem:[%s240 + $0x50] sm:$0xff] %v1895
      %1936 = vst [vmem:[%s240 + $0x58] sm:$0xff] %v1896
      %1937 = vst [vmem:[%s240 + $0x60] sm:$0xff] %v1897
      %1938 = vst [vmem:[%s240 + $0x68] sm:$0xf] %v1898
      %1939 = vst [vmem:[%s240 + $0x6c] sm:$0xff] %v1899
      %1940 = vst [vmem:[%s240 + $0x74] sm:$0xff] %v1900
      %1941 = vst [vmem:[%s240 + $0x7c] sm:$0xff] %v1901
      %1942 = vst [vmem:[%s240 + $0x84] sm:$0xff] %v1902
      %1943 = vst [vmem:[%s240 + $0x8c] sm:$0xf] %v1903
      %s1944 = smul.u32 4, %s18
      %s1945 = smul.u32 9, %s19
      %p1946 = scmp.lt.s32.totalorder %s1944, 7
      %s1947 = scalar_select %p1946, %s1944, 7
      %p1948 = scmp.lt.s32.totalorder %s1945, 8
      %s1949 = scalar_select %p1948, %s1945, 8
      %s1950 = smul.addr %s1947, 9
      %s1951 = sadd.s32 %s1949, %s1950
      %s1952 = smul.addr %s1951, 4
      %s1953 = scalar_lea.vmem %s3, %s1952
      // Predicated region
      $region33: #{gcn_block_forward.1} parent=31 // pred_check
        %p1954 = pneg %p124
      $region34: #{gcn_block_forward.1} parent=31 // pred_check_branch
        %1956 = sbr.rel (%p1954) target = $region36
      $region35: #{gcn_block_forward.1} parent=31 // pred_region
        %s1957 = smul.u32 4, %s18
        %s1958 = smul.u32 9, %s19
      $region36: #{gcn_block_forward.1} parent=31 // pred_fallthru
        _
    $region32: #{gcn_block_forward.1} parent=5 // pred_fallthru
      _
    %p1959 = scmp.le.s32.totalorder 2, %s9
    // Predicated region
    $region37: #{gcn_block_forward.1} parent=5 // pred_check
      %p1960 = pneg %p1959
    $region38: #{gcn_block_forward.1} parent=5 // pred_check_branch
      %1962 = sbr.rel (%p1960) target = $region40
    $region39: #{gcn_block_forward.1} parent=5 // pred_region
      %s1963 = ssub.s32 %s9, 2
      // Predicated region
      $region41: #{gcn_block_forward.1} parent=39 // pred_check
        %p1964 = pneg %p130
      $region42: #{gcn_block_forward.1} parent=39 // pred_check_branch
        %1966 = sbr.rel (%p1964) target = $region44
      $region43: #{gcn_block_forward.1} parent=39 // pred_region
        %s1967 = smul.u32 4, %s20
        %s1968 = smul.u32 9, %s21
        %p1969 = scmp.lt.s32.totalorder %s1967, 7
        %s1970 = scalar_select %p1969, %s1967, 7
        %p1971 = scmp.lt.s32.totalorder %s1968, 8
        %s1972 = scalar_select %p1971, %s1968, 8
        %s1973 = smul.addr %s1970, 9
        %s1974 = sadd.s32 %s1972, %s1973
        %s1975 = smul.addr %s1974, 4
        %s1976 = scalar_lea.vmem %s3, %s1975
      $region44: #{gcn_block_forward.1} parent=39 // pred_fallthru
        _
    $region40: #{gcn_block_forward.1} parent=5 // pred_fallthru
      _
  $region6: #{gcn_block_forward.1} parent=0 // loop_footer
    %s13 = sadd.s32 1, %s9
  $region7: #{gcn_block_forward.1} parent=0 // loop_footer_branch
    %8 = sbr.rel target = $region3
  $region8: #{gcn_block_forward.1} parent=0 // loop_exit
    _

</llo_original>
